<compile_context>
chip_gen: v7x
topology: tpu7x:2x2x1
jax: 0.10.0
libtpu: 0.0.40
codegen_flags: <defaults>
</compile_context>

<pallas_src>
import functools

import jax
import jax.numpy as jnp
from jax import lax
from jax.experimental import pallas as pl
from jax.experimental.pallas import tpu as pltpu


def _classificator_kernel(
    embed_ref,                       # (T, bb, E)  bf16, time-major
    wih0_ref, whh0_ref, b0_ref,      # (E, 4H) bf16, (H, 4H) bf16, (1, 4H) f32
    wih1_ref, whh1_ref, b1_ref,      # (H, 4H) bf16, (H, 4H) bf16, (1, 4H) f32
    fcw_ref, fcb_ref,                # (H, O)  bf16 (BN folded), (1, O) f32
    clsw_ref, clsb_ref,              # (O, Cp) bf16, (1, Cp) f32
    out_ref,                         # (bb, Cp) f32
    *, seq_len,
):
    T = seq_len
    bb = embed_ref.shape[1]
    H = whh0_ref.shape[0]

    wih0 = wih0_ref[...]
    whh0 = whh0_ref[...]
    b0 = b0_ref[...]
    wih1 = wih1_ref[...]
    whh1 = whh1_ref[...]
    b1 = b1_ref[...]

    def mm(a, w):
        return jnp.dot(a, w, preferred_element_type=jnp.float32)

    def act(gates, c_prev):
        # Gate order (i, f, o, g): one sigmoid over 3H lanes + one tanh over H
        # lanes — half the transcendental work of activating the full 4H twice.
        # (For real shapes pick H as a multiple of 128 so these lane slices are
        # free vreg selections.)
        sig = jax.nn.sigmoid(gates[:, :3 * H])
        g = jnp.tanh(gates[:, 3 * H:])
        i = sig[:, :H]
        f = sig[:, H:2 * H]
        o = sig[:, 2 * H:3 * H]
        c_new = f * c_prev + i * g
        # h is only ever used as a matmul LHS -> cast to bf16 once, here.
        h_new = (o * jnp.tanh(c_new)).astype(jnp.bfloat16)
        return h_new, c_new

    zero_c = jnp.zeros((bb, H), jnp.float32)
    zero_h = jnp.zeros((bb, H), jnp.bfloat16)

    # ---- wave 0: layer-0 step 0 (h0_{-1} = c0_{-1} = 0) ----
    h0, c0 = act(mm(embed_ref[0], wih0) + b0, zero_c)
    h1, c1 = zero_h, zero_c

    # ---- waves t = 1..T-1: layer-0 step t  +  layer-1 step t-1 ----
    # All four MXU pushes per wave depend only on the previous wave's carries,
    # so they issue back-to-back (MRF latency hidden by independent work).
    def wave(t, carry):
        h0, c0, h1, c1 = carry
        g0 = mm(embed_ref[t], wih0) + mm(h0, whh0) + b0    # layer-0 step t
        g1 = mm(h0, wih1) + mm(h1, whh1) + b1              # layer-1 step t-1
        h0n, c0n = act(g0, c0)
        h1n, c1n = act(g1, c1)
        return h0n, c0n, h1n, c1n

    carry = (h0, c0, h1, c1)
    if T <= 16:
        # Small static T: full unroll gives the LLO scheduler full visibility.
        for t in range(1, T):
            carry = wave(t, carry)
    else:
        # Long sequences: bounded unroll keeps compile time / vreg pressure sane.
        carry = lax.fori_loop(1, T, wave, carry, unroll=4)
    h0, _c0, h1, c1 = carry

    # ---- epilogue: layer-1 step T-1  ->  hidden_t[-1] ----
    g1 = mm(h0, wih1) + mm(h1, whh1) + b1
    h1, _ = act(g1, c1)

    # ---- fc (BatchNorm pre-folded) -> ReLU -> classifier ----
    y = jnp.maximum(mm(h1, fcw_ref[...]) + fcb_ref[...], 0.0)
    out_ref[...] = mm(y.astype(jnp.bfloat16), clsw_ref[...]) + clsb_ref[...]


def _permute_gates(w):
    """PyTorch LSTM gate column order (i, f, g, o) -> kernel order (i, f, o, g)."""
    H = w.shape[-1] // 4
    return jnp.concatenate(
        [w[..., :2 * H], w[..., 3 * H:], w[..., 2 * H:3 * H]], axis=-1)


@functools.partial(jax.jit, static_argnames=("batch_block",))
def classificator_forward(embed, params, batch_block=None):
    """embed: (B, T, E) float32 (batch_first, as in the PyTorch module)."""
    B, T, E = embed.shape
    H = params["whh0"].shape[0]
    C = params["clsw"].shape[1]
    C_pad = max(128, ((C + 127) // 128) * 128)

    if batch_block is None:
        # Split the batch over v7x's two TensorCores only when each half keeps
        # >= 8 f32 sublane rows; otherwise a single block (v5e/v6e have 1 TC).
        batch_block = B // 2 if (B % 16 == 0) else B
    assert B % batch_block == 0
    nb = B // batch_block

    bf16 = lambda a: a.astype(jnp.bfloat16)

    # Time-major so per-step access in the kernel is a cheap leading-axis read.
    embed_tm = bf16(jnp.transpose(embed, (1, 0, 2)))            # (T, B, E)

    # Gate permutation (i,f,g,o) -> (i,f,o,g); weights to bf16 for the MXU.
    # (In a real deployment these folds are done once at load time.)
    wih0 = bf16(_permute_gates(params["wih0"]))
    whh0 = bf16(_permute_gates(params["whh0"]))
    b0 = _permute_gates(params["b0"])
    wih1 = bf16(_permute_gates(params["wih1"]))
    whh1 = bf16(_permute_gates(params["whh1"]))
    b1 = _permute_gates(params["b1"])

    # Fold eval-mode BatchNorm1d (running stats, eps=1e-5) into fc weight/bias.
    scale = params["bng"] * lax.rsqrt(params["bnv"] + 1e-5)          # (1, O)
    fcw = bf16(params["fcw"] * scale)                                # (H, O)
    fcb = (params["fcb"] - params["bnm"]) * scale + params["bnb"]    # (1, O)

    # Pad classifier to a full 128-lane tile -> unmasked final store.
    clsw = bf16(jnp.pad(params["clsw"], ((0, 0), (0, C_pad - C))))
    clsb = jnp.pad(params["clsb"], ((0, 0), (0, C_pad - C)))

    args = (embed_tm, wih0, whh0, b0, wih1, whh1, b1, fcw, fcb, clsw, clsb)

    def full(shape):
        n = len(shape)
        return pl.BlockSpec(shape, lambda b, n=n: (0,) * n)

    in_specs = ([pl.BlockSpec((T, batch_block, E), lambda b: (0, b, 0))]
                + [full(a.shape) for a in args[1:]])
    out_spec = pl.BlockSpec((batch_block, C_pad), lambda b: (b, 0))

    kernel = functools.partial(_classificator_kernel, seq_len=T)
    out = pl.pallas_call(
        kernel,
        out_shape=jax.ShapeDtypeStruct((B, C_pad), jnp.float32),
        grid=(nb,),
        in_specs=in_specs,
        out_specs=out_spec,
        compiler_params=pltpu.CompilerParams(
            dimension_semantics=("parallel",)),
    )(*args)
    return out[:, :C]


def init_params(key, embed_size, hidden_size, output_size, n_classes):
    """Deterministic synthetic parameters with PyTorch nn.LSTM/Linear/BN shapes.

    LSTM weights are stored pre-transposed ((in, 4H), PyTorch gate order
    i,f,g,o) and the two bias vectors (b_ih + b_hh) are pre-summed, which is
    mathematically identical.  Real checkpoints must be transposed/summed the
    same way in the loader.
    """
    ks = jax.random.split(key, 16)
    s = 0.1

    def rnd(k, shape):
        return (s * jax.random.normal(k, shape, jnp.float32)).astype(jnp.float32)

    H, E, O, C = hidden_size, embed_size, output_size, n_classes
    params = {
        "wih0": rnd(ks[0], (E, 4 * H)),
        "whh0": rnd(ks[1], (H, 4 * H)),
        "b0":   rnd(ks[2], (1, 4 * H)) + rnd(ks[3], (1, 4 * H)),
        "wih1": rnd(ks[4], (H, 4 * H)),
        "whh1": rnd(ks[5], (H, 4 * H)),
        "b1":   rnd(ks[6], (1, 4 * H)) + rnd(ks[7], (1, 4 * H)),
        "fcw":  rnd(ks[8], (H, O)),
        "fcb":  rnd(ks[9], (1, O)),
        "bng":  1.0 + rnd(ks[10], (1, O)),
        "bnb":  rnd(ks[11], (1, O)),
        "bnm":  rnd(ks[12], (1, O)),
        "bnv":  0.5 + jnp.abs(rnd(ks[13], (1, O))),
        "clsw": rnd(ks[14], (O, C)),
        "clsb": rnd(ks[15], (1, C)),
    }
    return params


@jax.jit
def _reference_forward(embed, params):
    """Pure-JAX f32 reference (PyTorch gate order, eval-mode BN/dropout)."""
    B, T, E = embed.shape
    H = params["whh0"].shape[0]

    def lstm_layer(x_seq, wih, whh, b):
        def step(carry, x_t):
            h, c = carry
            gates = x_t @ wih + h @ whh + b            # (B, 4H), order i,f,g,o
            i = jax.nn.sigmoid(gates[:, :H])
            f = jax.nn.sigmoid(gates[:, H:2 * H])
            g = jnp.tanh(gates[:, 2 * H:3 * H])
            o = jax.nn.sigmoid(gates[:, 3 * H:])
            c = f * c + i * g
            h = o * jnp.tanh(c)
            return (h, c), h
        init = (jnp.zeros((B, H), jnp.float32), jnp.zeros((B, H), jnp.float32))
        (h, _), hs = lax.scan(step, init, x_seq)
        return hs, h

    x = jnp.transpose(embed, (1, 0, 2))                 # (T, B, E)
    hs0, _ = lstm_layer(x, params["wih0"], params["whh0"], params["b0"])
    _, h1 = lstm_layer(hs0, params["wih1"], params["whh1"], params["b1"])
    y = h1 @ params["fcw"] + params["fcb"]
    y = (params["bng"] * (y - params["bnm"]) * lax.rsqrt(params["bnv"] + 1e-5)
         + params["bnb"])
    y = jnp.maximum(y, 0.0)
    return y @ params["clsw"] + params["clsb"]


if __name__ == "__main__":
    # Small shapes consistent with the module's forward.
    B, T = 2, 8
    embed_size, hidden_size, output_size, n_classes = 16, 32, 8, 5

    key = jax.random.PRNGKey(0)
    k_x, k_p = jax.random.split(key)
    embed = jax.random.normal(k_x, (B, T, embed_size), jnp.float32)
    params = init_params(k_p, embed_size, hidden_size, output_size, n_classes)

    scores = classificator_forward(embed, params)
    jax.block_until_ready(scores)
    assert scores.shape == (B, n_classes)

    # Correctness vs. f32 reference (bf16 MXU operands -> loose tolerance).
    ref = _reference_forward(embed, params)
    assert jnp.allclose(scores, ref, atol=5e-2, rtol=5e-2), float(
        jnp.max(jnp.abs(scores - ref)))

    print("KERNEL_OK")
</pallas_src>

<mosaic_0001>
module attributes {stable_mosaic.version = 11 : i64} {
  func.func @_classificator_kernel(%arg0: i32, %arg1: memref<8x2x16xbf16, #tpu.memory_space<vmem>>, %arg2: memref<16x128xbf16, #tpu.memory_space<vmem>>, %arg3: memref<32x128xbf16, #tpu.memory_space<vmem>>, %arg4: memref<1x128xf32, #tpu.memory_space<vmem>>, %arg5: memref<32x128xbf16, #tpu.memory_space<vmem>>, %arg6: memref<32x128xbf16, #tpu.memory_space<vmem>>, %arg7: memref<1x128xf32, #tpu.memory_space<vmem>>, %arg8: memref<32x8xbf16, #tpu.memory_space<vmem>>, %arg9: memref<1x8xf32, #tpu.memory_space<vmem>>, %arg10: memref<8x128xbf16, #tpu.memory_space<vmem>>, %arg11: memref<1x128xf32, #tpu.memory_space<vmem>>, %arg12: memref<2x128xf32, #tpu.memory_space<vmem>>) attributes {dimension_semantics = [#tpu.dimension_semantics<parallel>], iteration_bounds = array<i64: 1>, scalar_prefetch = 0 : i64, scratch_operands = 0 : i64, tpu.core_type = #tpu.core_type<tc>, window_params = [{transform_indices = @transform_0, window_bounds = array<i64: 8, 2, 16>}, {pipeline_mode = #tpu.pipeline_mode<synchronous>, transform_indices = @transform_1, window_bounds = array<i64: 16, 128>}, {pipeline_mode = #tpu.pipeline_mode<synchronous>, transform_indices = @transform_2, window_bounds = array<i64: 32, 128>}, {pipeline_mode = #tpu.pipeline_mode<synchronous>, transform_indices = @transform_3, window_bounds = array<i64: 1, 128>}, {pipeline_mode = #tpu.pipeline_mode<synchronous>, transform_indices = @transform_4, window_bounds = array<i64: 32, 128>}, {pipeline_mode = #tpu.pipeline_mode<synchronous>, transform_indices = @transform_5, window_bounds = array<i64: 32, 128>}, {pipeline_mode = #tpu.pipeline_mode<synchronous>, transform_indices = @transform_6, window_bounds = array<i64: 1, 128>}, {pipeline_mode = #tpu.pipeline_mode<synchronous>, transform_indices = @transform_7, window_bounds = array<i64: 32, 8>}, {pipeline_mode = #tpu.pipeline_mode<synchronous>, transform_indices = @transform_8, window_bounds = array<i64: 1, 8>}, {pipeline_mode = #tpu.pipeline_mode<synchronous>, transform_indices = @transform_9, window_bounds = array<i64: 8, 128>}, {pipeline_mode = #tpu.pipeline_mode<synchronous>, transform_indices = @transform_10, window_bounds = array<i64: 1, 128>}, {transform_indices = @transform_11, window_bounds = array<i64: 2, 128>}]} {
    %c0 = arith.constant 0 : index
    %c0_0 = arith.constant 0 : index
    %0 = vector.load %arg2[%c0, %c0_0] : memref<16x128xbf16, #tpu.memory_space<vmem>>, vector<16x128xbf16>
    %c0_1 = arith.constant 0 : index
    %c0_2 = arith.constant 0 : index
    %1 = vector.load %arg3[%c0_1, %c0_2] : memref<32x128xbf16, #tpu.memory_space<vmem>>, vector<32x128xbf16>
    %c0_3 = arith.constant 0 : index
    %c0_4 = arith.constant 0 : index
    %2 = vector.load %arg4[%c0_3, %c0_4] : memref<1x128xf32, #tpu.memory_space<vmem>>, vector<1x128xf32>
    %c0_5 = arith.constant 0 : index
    %c0_6 = arith.constant 0 : index
    %3 = vector.load %arg5[%c0_5, %c0_6] : memref<32x128xbf16, #tpu.memory_space<vmem>>, vector<32x128xbf16>
    %c0_7 = arith.constant 0 : index
    %c0_8 = arith.constant 0 : index
    %4 = vector.load %arg6[%c0_7, %c0_8] : memref<32x128xbf16, #tpu.memory_space<vmem>>, vector<32x128xbf16>
    %c0_9 = arith.constant 0 : index
    %c0_10 = arith.constant 0 : index
    %5 = vector.load %arg7[%c0_9, %c0_10] : memref<1x128xf32, #tpu.memory_space<vmem>>, vector<1x128xf32>
    %cst = arith.constant 0.000000e+00 : f32
    %6 = vector.broadcast %cst : f32 to vector<2x32xf32>
    %cst_11 = arith.constant 0.000000e+00 : bf16
    %7 = vector.broadcast %cst_11 : bf16 to vector<2x32xbf16>
    %c0_12 = arith.constant 0 : index
    %c0_13 = arith.constant 0 : index
    %c0_14 = arith.constant 0 : index
    %8 = vector.load %arg1[%c0_12, %c0_13, %c0_14] : memref<8x2x16xbf16, #tpu.memory_space<vmem>>, vector<1x2x16xbf16>
    %9 = vector.shape_cast %8 : vector<1x2x16xbf16> to vector<2x16xbf16>
    %cst_15 = arith.constant dense<0.000000e+00> : vector<2x128xf32>
    %10 = tpu.matmul %9, %0, %cst_15 {dimension_numbers = #tpu.dot_dimension_numbers<[1], [0], [0], [1], [0, 0, 1, 1], [], []>} : vector<2x16xbf16>, vector<16x128xbf16>, vector<2x128xf32> -> vector<2x128xf32>
    %11 = vector.broadcast %2 : vector<1x128xf32> to vector<2x128xf32>
    %12 = arith.addf %10, %11 : vector<2x128xf32>
    %13 = vector.extract_strided_slice %12 {offsets = [0, 0], sizes = [2, 96], strides = [1, 1]} : vector<2x128xf32> to vector<2x96xf32>
    %14 = arith.negf %13 : vector<2x96xf32>
    %15 = math.exp %14 : vector<2x96xf32>
    %cst_16 = arith.constant 1.000000e+00 : f32
    %16 = vector.broadcast %cst_16 : f32 to vector<2x96xf32>
    %17 = arith.addf %16, %15 : vector<2x96xf32>
    %18 = arith.divf %16, %17 : vector<2x96xf32>
    %19 = vector.extract_strided_slice %12 {offsets = [0, 96], sizes = [2, 32], strides = [1, 1]} : vector<2x128xf32> to vector<2x32xf32>
    %20 = math.tanh %19 : vector<2x32xf32>
    %21 = vector.extract_strided_slice %18 {offsets = [0, 0], sizes = [2, 32], strides = [1, 1]} : vector<2x96xf32> to vector<2x32xf32>
    %22 = vector.extract_strided_slice %18 {offsets = [0, 32], sizes = [2, 32], strides = [1, 1]} : vector<2x96xf32> to vector<2x32xf32>
    %23 = vector.extract_strided_slice %18 {offsets = [0, 64], sizes = [2, 32], strides = [1, 1]} : vector<2x96xf32> to vector<2x32xf32>
    %24 = arith.mulf %22, %6 : vector<2x32xf32>
    %25 = arith.mulf %21, %20 : vector<2x32xf32>
    %26 = arith.addf %24, %25 : vector<2x32xf32>
    %27 = math.tanh %26 : vector<2x32xf32>
    %28 = arith.mulf %23, %27 : vector<2x32xf32>
    %29 = arith.truncf %28 : vector<2x32xf32> to vector<2x32xbf16>
    %c1 = arith.constant 1 : index
    %c0_17 = arith.constant 0 : index
    %c0_18 = arith.constant 0 : index
    %30 = vector.load %arg1[%c1, %c0_17, %c0_18] : memref<8x2x16xbf16, #tpu.memory_space<vmem>>, vector<1x2x16xbf16>
    %31 = vector.shape_cast %30 : vector<1x2x16xbf16> to vector<2x16xbf16>
    %cst_19 = arith.constant dense<0.000000e+00> : vector<2x128xf32>
    %32 = tpu.matmul %31, %0, %cst_19 {dimension_numbers = #tpu.dot_dimension_numbers<[1], [0], [0], [1], [0, 0, 1, 1], [], []>} : vector<2x16xbf16>, vector<16x128xbf16>, vector<2x128xf32> -> vector<2x128xf32>
    %cst_20 = arith.constant dense<0.000000e+00> : vector<2x128xf32>
    %33 = tpu.matmul %29, %1, %cst_20 {dimension_numbers = #tpu.dot_dimension_numbers<[1], [0], [0], [1], [0, 0, 1, 1], [], []>} : vector<2x32xbf16>, vector<32x128xbf16>, vector<2x128xf32> -> vector<2x128xf32>
    %34 = arith.addf %32, %33 : vector<2x128xf32>
    %35 = vector.broadcast %2 : vector<1x128xf32> to vector<2x128xf32>
    %36 = arith.addf %34, %35 : vector<2x128xf32>
    %cst_21 = arith.constant dense<0.000000e+00> : vector<2x128xf32>
    %37 = tpu.matmul %29, %3, %cst_21 {dimension_numbers = #tpu.dot_dimension_numbers<[1], [0], [0], [1], [0, 0, 1, 1], [], []>} : vector<2x32xbf16>, vector<32x128xbf16>, vector<2x128xf32> -> vector<2x128xf32>
    %cst_22 = arith.constant dense<0.000000e+00> : vector<2x128xf32>
    %38 = tpu.matmul %7, %4, %cst_22 {dimension_numbers = #tpu.dot_dimension_numbers<[1], [0], [0], [1], [0, 0, 1, 1], [], []>} : vector<2x32xbf16>, vector<32x128xbf16>, vector<2x128xf32> -> vector<2x128xf32>
    %39 = arith.addf %37, %38 : vector<2x128xf32>
    %40 = vector.broadcast %5 : vector<1x128xf32> to vector<2x128xf32>
    %41 = arith.addf %39, %40 : vector<2x128xf32>
    %42 = vector.extract_strided_slice %36 {offsets = [0, 0], sizes = [2, 96], strides = [1, 1]} : vector<2x128xf32> to vector<2x96xf32>
    %43 = arith.negf %42 : vector<2x96xf32>
    %44 = math.exp %43 : vector<2x96xf32>
    %cst_23 = arith.constant 1.000000e+00 : f32
    %45 = vector.broadcast %cst_23 : f32 to vector<2x96xf32>
    %46 = arith.addf %45, %44 : vector<2x96xf32>
    %47 = arith.divf %45, %46 : vector<2x96xf32>
    %48 = vector.extract_strided_slice %36 {offsets = [0, 96], sizes = [2, 32], strides = [1, 1]} : vector<2x128xf32> to vector<2x32xf32>
    %49 = math.tanh %48 : vector<2x32xf32>
    %50 = vector.extract_strided_slice %47 {offsets = [0, 0], sizes = [2, 32], strides = [1, 1]} : vector<2x96xf32> to vector<2x32xf32>
    %51 = vector.extract_strided_slice %47 {offsets = [0, 32], sizes = [2, 32], strides = [1, 1]} : vector<2x96xf32> to vector<2x32xf32>
    %52 = vector.extract_strided_slice %47 {offsets = [0, 64], sizes = [2, 32], strides = [1, 1]} : vector<2x96xf32> to vector<2x32xf32>
    %53 = arith.mulf %51, %26 : vector<2x32xf32>
    %54 = arith.mulf %50, %49 : vector<2x32xf32>
    %55 = arith.addf %53, %54 : vector<2x32xf32>
    %56 = math.tanh %55 : vector<2x32xf32>
    %57 = arith.mulf %52, %56 : vector<2x32xf32>
    %58 = arith.truncf %57 : vector<2x32xf32> to vector<2x32xbf16>
    %59 = vector.extract_strided_slice %41 {offsets = [0, 0], sizes = [2, 96], strides = [1, 1]} : vector<2x128xf32> to vector<2x96xf32>
    %60 = arith.negf %59 : vector<2x96xf32>
    %61 = math.exp %60 : vector<2x96xf32>
    %cst_24 = arith.constant 1.000000e+00 : f32
    %62 = vector.broadcast %cst_24 : f32 to vector<2x96xf32>
    %63 = arith.addf %62, %61 : vector<2x96xf32>
    %64 = arith.divf %62, %63 : vector<2x96xf32>
    %65 = vector.extract_strided_slice %41 {offsets = [0, 96], sizes = [2, 32], strides = [1, 1]} : vector<2x128xf32> to vector<2x32xf32>
    %66 = math.tanh %65 : vector<2x32xf32>
    %67 = vector.extract_strided_slice %64 {offsets = [0, 0], sizes = [2, 32], strides = [1, 1]} : vector<2x96xf32> to vector<2x32xf32>
    %68 = vector.extract_strided_slice %64 {offsets = [0, 32], sizes = [2, 32], strides = [1, 1]} : vector<2x96xf32> to vector<2x32xf32>
    %69 = vector.extract_strided_slice %64 {offsets = [0, 64], sizes = [2, 32], strides = [1, 1]} : vector<2x96xf32> to vector<2x32xf32>
    %70 = arith.mulf %68, %6 : vector<2x32xf32>
    %71 = arith.mulf %67, %66 : vector<2x32xf32>
    %72 = arith.addf %70, %71 : vector<2x32xf32>
    %73 = math.tanh %72 : vector<2x32xf32>
    %74 = arith.mulf %69, %73 : vector<2x32xf32>
    %75 = arith.truncf %74 : vector<2x32xf32> to vector<2x32xbf16>
    %c2 = arith.constant 2 : index
    %c0_25 = arith.constant 0 : index
    %c0_26 = arith.constant 0 : index
    %76 = vector.load %arg1[%c2, %c0_25, %c0_26] : memref<8x2x16xbf16, #tpu.memory_space<vmem>>, vector<1x2x16xbf16>
    %77 = vector.shape_cast %76 : vector<1x2x16xbf16> to vector<2x16xbf16>
    %cst_27 = arith.constant dense<0.000000e+00> : vector<2x128xf32>
    %78 = tpu.matmul %77, %0, %cst_27 {dimension_numbers = #tpu.dot_dimension_numbers<[1], [0], [0], [1], [0, 0, 1, 1], [], []>} : vector<2x16xbf16>, vector<16x128xbf16>, vector<2x128xf32> -> vector<2x128xf32>
    %cst_28 = arith.constant dense<0.000000e+00> : vector<2x128xf32>
    %79 = tpu.matmul %58, %1, %cst_28 {dimension_numbers = #tpu.dot_dimension_numbers<[1], [0], [0], [1], [0, 0, 1, 1], [], []>} : vector<2x32xbf16>, vector<32x128xbf16>, vector<2x128xf32> -> vector<2x128xf32>
    %80 = arith.addf %78, %79 : vector<2x128xf32>
    %81 = vector.broadcast %2 : vector<1x128xf32> to vector<2x128xf32>
    %82 = arith.addf %80, %81 : vector<2x128xf32>
    %cst_29 = arith.constant dense<0.000000e+00> : vector<2x128xf32>
    %83 = tpu.matmul %58, %3, %cst_29 {dimension_numbers = #tpu.dot_dimension_numbers<[1], [0], [0], [1], [0, 0, 1, 1], [], []>} : vector<2x32xbf16>, vector<32x128xbf16>, vector<2x128xf32> -> vector<2x128xf32>
    %cst_30 = arith.constant dense<0.000000e+00> : vector<2x128xf32>
    %84 = tpu.matmul %75, %4, %cst_30 {dimension_numbers = #tpu.dot_dimension_numbers<[1], [0], [0], [1], [0, 0, 1, 1], [], []>} : vector<2x32xbf16>, vector<32x128xbf16>, vector<2x128xf32> -> vector<2x128xf32>
    %85 = arith.addf %83, %84 : vector<2x128xf32>
    %86 = vector.broadcast %5 : vector<1x128xf32> to vector<2x128xf32>
    %87 = arith.addf %85, %86 : vector<2x128xf32>
    %88 = vector.extract_strided_slice %82 {offsets = [0, 0], sizes = [2, 96], strides = [1, 1]} : vector<2x128xf32> to vector<2x96xf32>
    %89 = arith.negf %88 : vector<2x96xf32>
    %90 = math.exp %89 : vector<2x96xf32>
    %cst_31 = arith.constant 1.000000e+00 : f32
    %91 = vector.broadcast %cst_31 : f32 to vector<2x96xf32>
    %92 = arith.addf %91, %90 : vector<2x96xf32>
    %93 = arith.divf %91, %92 : vector<2x96xf32>
    %94 = vector.extract_strided_slice %82 {offsets = [0, 96], sizes = [2, 32], strides = [1, 1]} : vector<2x128xf32> to vector<2x32xf32>
    %95 = math.tanh %94 : vector<2x32xf32>
    %96 = vector.extract_strided_slice %93 {offsets = [0, 0], sizes = [2, 32], strides = [1, 1]} : vector<2x96xf32> to vector<2x32xf32>
    %97 = vector.extract_strided_slice %93 {offsets = [0, 32], sizes = [2, 32], strides = [1, 1]} : vector<2x96xf32> to vector<2x32xf32>
    %98 = vector.extract_strided_slice %93 {offsets = [0, 64], sizes = [2, 32], strides = [1, 1]} : vector<2x96xf32> to vector<2x32xf32>
    %99 = arith.mulf %97, %55 : vector<2x32xf32>
    %100 = arith.mulf %96, %95 : vector<2x32xf32>
    %101 = arith.addf %99, %100 : vector<2x32xf32>
    %102 = math.tanh %101 : vector<2x32xf32>
    %103 = arith.mulf %98, %102 : vector<2x32xf32>
    %104 = arith.truncf %103 : vector<2x32xf32> to vector<2x32xbf16>
    %105 = vector.extract_strided_slice %87 {offsets = [0, 0], sizes = [2, 96], strides = [1, 1]} : vector<2x128xf32> to vector<2x96xf32>
    %106 = arith.negf %105 : vector<2x96xf32>
    %107 = math.exp %106 : vector<2x96xf32>
    %cst_32 = arith.constant 1.000000e+00 : f32
    %108 = vector.broadcast %cst_32 : f32 to vector<2x96xf32>
    %109 = arith.addf %108, %107 : vector<2x96xf32>
    %110 = arith.divf %108, %109 : vector<2x96xf32>
    %111 = vector.extract_strided_slice %87 {offsets = [0, 96], sizes = [2, 32], strides = [1, 1]} : vector<2x128xf32> to vector<2x32xf32>
    %112 = math.tanh %111 : vector<2x32xf32>
    %113 = vector.extract_strided_slice %110 {offsets = [0, 0], sizes = [2, 32], strides = [1, 1]} : vector<2x96xf32> to vector<2x32xf32>
    %114 = vector.extract_strided_slice %110 {offsets = [0, 32], sizes = [2, 32], strides = [1, 1]} : vector<2x96xf32> to vector<2x32xf32>
    %115 = vector.extract_strided_slice %110 {offsets = [0, 64], sizes = [2, 32], strides = [1, 1]} : vector<2x96xf32> to vector<2x32xf32>
    %116 = arith.mulf %114, %72 : vector<2x32xf32>
    %117 = arith.mulf %113, %112 : vector<2x32xf32>
    %118 = arith.addf %116, %117 : vector<2x32xf32>
    %119 = math.tanh %118 : vector<2x32xf32>
    %120 = arith.mulf %115, %119 : vector<2x32xf32>
    %121 = arith.truncf %120 : vector<2x32xf32> to vector<2x32xbf16>
    %c3 = arith.constant 3 : index
    %c0_33 = arith.constant 0 : index
    %c0_34 = arith.constant 0 : index
    %122 = vector.load %arg1[%c3, %c0_33, %c0_34] : memref<8x2x16xbf16, #tpu.memory_space<vmem>>, vector<1x2x16xbf16>
    %123 = vector.shape_cast %122 : vector<1x2x16xbf16> to vector<2x16xbf16>
    %cst_35 = arith.constant dense<0.000000e+00> : vector<2x128xf32>
    %124 = tpu.matmul %123, %0, %cst_35 {dimension_numbers = #tpu.dot_dimension_numbers<[1], [0], [0], [1], [0, 0, 1, 1], [], []>} : vector<2x16xbf16>, vector<16x128xbf16>, vector<2x128xf32> -> vector<2x128xf32>
    %cst_36 = arith.constant dense<0.000000e+00> : vector<2x128xf32>
    %125 = tpu.matmul %104, %1, %cst_36 {dimension_numbers = #tpu.dot_dimension_numbers<[1], [0], [0], [1], [0, 0, 1, 1], [], []>} : vector<2x32xbf16>, vector<32x128xbf16>, vector<2x128xf32> -> vector<2x128xf32>
    %126 = arith.addf %124, %125 : vector<2x128xf32>
    %127 = vector.broadcast %2 : vector<1x128xf32> to vector<2x128xf32>
    %128 = arith.addf %126, %127 : vector<2x128xf32>
    %cst_37 = arith.constant dense<0.000000e+00> : vector<2x128xf32>
    %129 = tpu.matmul %104, %3, %cst_37 {dimension_numbers = #tpu.dot_dimension_numbers<[1], [0], [0], [1], [0, 0, 1, 1], [], []>} : vector<2x32xbf16>, vector<32x128xbf16>, vector<2x128xf32> -> vector<2x128xf32>
    %cst_38 = arith.constant dense<0.000000e+00> : vector<2x128xf32>
    %130 = tpu.matmul %121, %4, %cst_38 {dimension_numbers = #tpu.dot_dimension_numbers<[1], [0], [0], [1], [0, 0, 1, 1], [], []>} : vector<2x32xbf16>, vector<32x128xbf16>, vector<2x128xf32> -> vector<2x128xf32>
    %131 = arith.addf %129, %130 : vector<2x128xf32>
    %132 = vector.broadcast %5 : vector<1x128xf32> to vector<2x128xf32>
    %133 = arith.addf %131, %132 : vector<2x128xf32>
    %134 = vector.extract_strided_slice %128 {offsets = [0, 0], sizes = [2, 96], strides = [1, 1]} : vector<2x128xf32> to vector<2x96xf32>
    %135 = arith.negf %134 : vector<2x96xf32>
    %136 = math.exp %135 : vector<2x96xf32>
    %cst_39 = arith.constant 1.000000e+00 : f32
    %137 = vector.broadcast %cst_39 : f32 to vector<2x96xf32>
    %138 = arith.addf %137, %136 : vector<2x96xf32>
    %139 = arith.divf %137, %138 : vector<2x96xf32>
    %140 = vector.extract_strided_slice %128 {offsets = [0, 96], sizes = [2, 32], strides = [1, 1]} : vector<2x128xf32> to vector<2x32xf32>
    %141 = math.tanh %140 : vector<2x32xf32>
    %142 = vector.extract_strided_slice %139 {offsets = [0, 0], sizes = [2, 32], strides = [1, 1]} : vector<2x96xf32> to vector<2x32xf32>
    %143 = vector.extract_strided_slice %139 {offsets = [0, 32], sizes = [2, 32], strides = [1, 1]} : vector<2x96xf32> to vector<2x32xf32>
    %144 = vector.extract_strided_slice %139 {offsets = [0, 64], sizes = [2, 32], strides = [1, 1]} : vector<2x96xf32> to vector<2x32xf32>
    %145 = arith.mulf %143, %101 : vector<2x32xf32>
    %146 = arith.mulf %142, %141 : vector<2x32xf32>
    %147 = arith.addf %145, %146 : vector<2x32xf32>
    %148 = math.tanh %147 : vector<2x32xf32>
    %149 = arith.mulf %144, %148 : vector<2x32xf32>
    %150 = arith.truncf %149 : vector<2x32xf32> to vector<2x32xbf16>
    %151 = vector.extract_strided_slice %133 {offsets = [0, 0], sizes = [2, 96], strides = [1, 1]} : vector<2x128xf32> to vector<2x96xf32>
    %152 = arith.negf %151 : vector<2x96xf32>
    %153 = math.exp %152 : vector<2x96xf32>
    %cst_40 = arith.constant 1.000000e+00 : f32
    %154 = vector.broadcast %cst_40 : f32 to vector<2x96xf32>
    %155 = arith.addf %154, %153 : vector<2x96xf32>
    %156 = arith.divf %154, %155 : vector<2x96xf32>
    %157 = vector.extract_strided_slice %133 {offsets = [0, 96], sizes = [2, 32], strides = [1, 1]} : vector<2x128xf32> to vector<2x32xf32>
    %158 = math.tanh %157 : vector<2x32xf32>
    %159 = vector.extract_strided_slice %156 {offsets = [0, 0], sizes = [2, 32], strides = [1, 1]} : vector<2x96xf32> to vector<2x32xf32>
    %160 = vector.extract_strided_slice %156 {offsets = [0, 32], sizes = [2, 32], strides = [1, 1]} : vector<2x96xf32> to vector<2x32xf32>
    %161 = vector.extract_strided_slice %156 {offsets = [0, 64], sizes = [2, 32], strides = [1, 1]} : vector<2x96xf32> to vector<2x32xf32>
    %162 = arith.mulf %160, %118 : vector<2x32xf32>
    %163 = arith.mulf %159, %158 : vector<2x32xf32>
    %164 = arith.addf %162, %163 : vector<2x32xf32>
    %165 = math.tanh %164 : vector<2x32xf32>
    %166 = arith.mulf %161, %165 : vector<2x32xf32>
    %167 = arith.truncf %166 : vector<2x32xf32> to vector<2x32xbf16>
    %c4 = arith.constant 4 : index
    %c0_41 = arith.constant 0 : index
    %c0_42 = arith.constant 0 : index
    %168 = vector.load %arg1[%c4, %c0_41, %c0_42] : memref<8x2x16xbf16, #tpu.memory_space<vmem>>, vector<1x2x16xbf16>
    %169 = vector.shape_cast %168 : vector<1x2x16xbf16> to vector<2x16xbf16>
    %cst_43 = arith.constant dense<0.000000e+00> : vector<2x128xf32>
    %170 = tpu.matmul %169, %0, %cst_43 {dimension_numbers = #tpu.dot_dimension_numbers<[1], [0], [0], [1], [0, 0, 1, 1], [], []>} : vector<2x16xbf16>, vector<16x128xbf16>, vector<2x128xf32> -> vector<2x128xf32>
    %cst_44 = arith.constant dense<0.000000e+00> : vector<2x128xf32>
    %171 = tpu.matmul %150, %1, %cst_44 {dimension_numbers = #tpu.dot_dimension_numbers<[1], [0], [0], [1], [0, 0, 1, 1], [], []>} : vector<2x32xbf16>, vector<32x128xbf16>, vector<2x128xf32> -> vector<2x128xf32>
    %172 = arith.addf %170, %171 : vector<2x128xf32>
    %173 = vector.broadcast %2 : vector<1x128xf32> to vector<2x128xf32>
    %174 = arith.addf %172, %173 : vector<2x128xf32>
    %cst_45 = arith.constant dense<0.000000e+00> : vector<2x128xf32>
    %175 = tpu.matmul %150, %3, %cst_45 {dimension_numbers = #tpu.dot_dimension_numbers<[1], [0], [0], [1], [0, 0, 1, 1], [], []>} : vector<2x32xbf16>, vector<32x128xbf16>, vector<2x128xf32> -> vector<2x128xf32>
    %cst_46 = arith.constant dense<0.000000e+00> : vector<2x128xf32>
    %176 = tpu.matmul %167, %4, %cst_46 {dimension_numbers = #tpu.dot_dimension_numbers<[1], [0], [0], [1], [0, 0, 1, 1], [], []>} : vector<2x32xbf16>, vector<32x128xbf16>, vector<2x128xf32> -> vector<2x128xf32>
    %177 = arith.addf %175, %176 : vector<2x128xf32>
    %178 = vector.broadcast %5 : vector<1x128xf32> to vector<2x128xf32>
    %179 = arith.addf %177, %178 : vector<2x128xf32>
    %180 = vector.extract_strided_slice %174 {offsets = [0, 0], sizes = [2, 96], strides = [1, 1]} : vector<2x128xf32> to vector<2x96xf32>
    %181 = arith.negf %180 : vector<2x96xf32>
    %182 = math.exp %181 : vector<2x96xf32>
    %cst_47 = arith.constant 1.000000e+00 : f32
    %183 = vector.broadcast %cst_47 : f32 to vector<2x96xf32>
    %184 = arith.addf %183, %182 : vector<2x96xf32>
    %185 = arith.divf %183, %184 : vector<2x96xf32>
    %186 = vector.extract_strided_slice %174 {offsets = [0, 96], sizes = [2, 32], strides = [1, 1]} : vector<2x128xf32> to vector<2x32xf32>
    %187 = math.tanh %186 : vector<2x32xf32>
    %188 = vector.extract_strided_slice %185 {offsets = [0, 0], sizes = [2, 32], strides = [1, 1]} : vector<2x96xf32> to vector<2x32xf32>
    %189 = vector.extract_strided_slice %185 {offsets = [0, 32], sizes = [2, 32], strides = [1, 1]} : vector<2x96xf32> to vector<2x32xf32>
    %190 = vector.extract_strided_slice %185 {offsets = [0, 64], sizes = [2, 32], strides = [1, 1]} : vector<2x96xf32> to vector<2x32xf32>
    %191 = arith.mulf %189, %147 : vector<2x32xf32>
    %192 = arith.mulf %188, %187 : vector<2x32xf32>
    %193 = arith.addf %191, %192 : vector<2x32xf32>
    %194 = math.tanh %193 : vector<2x32xf32>
    %195 = arith.mulf %190, %194 : vector<2x32xf32>
    %196 = arith.truncf %195 : vector<2x32xf32> to vector<2x32xbf16>
    %197 = vector.extract_strided_slice %179 {offsets = [0, 0], sizes = [2, 96], strides = [1, 1]} : vector<2x128xf32> to vector<2x96xf32>
    %198 = arith.negf %197 : vector<2x96xf32>
    %199 = math.exp %198 : vector<2x96xf32>
    %cst_48 = arith.constant 1.000000e+00 : f32
    %200 = vector.broadcast %cst_48 : f32 to vector<2x96xf32>
    %201 = arith.addf %200, %199 : vector<2x96xf32>
    %202 = arith.divf %200, %201 : vector<2x96xf32>
    %203 = vector.extract_strided_slice %179 {offsets = [0, 96], sizes = [2, 32], strides = [1, 1]} : vector<2x128xf32> to vector<2x32xf32>
    %204 = math.tanh %203 : vector<2x32xf32>
    %205 = vector.extract_strided_slice %202 {offsets = [0, 0], sizes = [2, 32], strides = [1, 1]} : vector<2x96xf32> to vector<2x32xf32>
    %206 = vector.extract_strided_slice %202 {offsets = [0, 32], sizes = [2, 32], strides = [1, 1]} : vector<2x96xf32> to vector<2x32xf32>
    %207 = vector.extract_strided_slice %202 {offsets = [0, 64], sizes = [2, 32], strides = [1, 1]} : vector<2x96xf32> to vector<2x32xf32>
    %208 = arith.mulf %206, %164 : vector<2x32xf32>
    %209 = arith.mulf %205, %204 : vector<2x32xf32>
    %210 = arith.addf %208, %209 : vector<2x32xf32>
    %211 = math.tanh %210 : vector<2x32xf32>
    %212 = arith.mulf %207, %211 : vector<2x32xf32>
    %213 = arith.truncf %212 : vector<2x32xf32> to vector<2x32xbf16>
    %c5 = arith.constant 5 : index
    %c0_49 = arith.constant 0 : index
    %c0_50 = arith.constant 0 : index
    %214 = vector.load %arg1[%c5, %c0_49, %c0_50] : memref<8x2x16xbf16, #tpu.memory_space<vmem>>, vector<1x2x16xbf16>
    %215 = vector.shape_cast %214 : vector<1x2x16xbf16> to vector<2x16xbf16>
    %cst_51 = arith.constant dense<0.000000e+00> : vector<2x128xf32>
    %216 = tpu.matmul %215, %0, %cst_51 {dimension_numbers = #tpu.dot_dimension_numbers<[1], [0], [0], [1], [0, 0, 1, 1], [], []>} : vector<2x16xbf16>, vector<16x128xbf16>, vector<2x128xf32> -> vector<2x128xf32>
    %cst_52 = arith.constant dense<0.000000e+00> : vector<2x128xf32>
    %217 = tpu.matmul %196, %1, %cst_52 {dimension_numbers = #tpu.dot_dimension_numbers<[1], [0], [0], [1], [0, 0, 1, 1], [], []>} : vector<2x32xbf16>, vector<32x128xbf16>, vector<2x128xf32> -> vector<2x128xf32>
    %218 = arith.addf %216, %217 : vector<2x128xf32>
    %219 = vector.broadcast %2 : vector<1x128xf32> to vector<2x128xf32>
    %220 = arith.addf %218, %219 : vector<2x128xf32>
    %cst_53 = arith.constant dense<0.000000e+00> : vector<2x128xf32>
    %221 = tpu.matmul %196, %3, %cst_53 {dimension_numbers = #tpu.dot_dimension_numbers<[1], [0], [0], [1], [0, 0, 1, 1], [], []>} : vector<2x32xbf16>, vector<32x128xbf16>, vector<2x128xf32> -> vector<2x128xf32>
    %cst_54 = arith.constant dense<0.000000e+00> : vector<2x128xf32>
    %222 = tpu.matmul %213, %4, %cst_54 {dimension_numbers = #tpu.dot_dimension_numbers<[1], [0], [0], [1], [0, 0, 1, 1], [], []>} : vector<2x32xbf16>, vector<32x128xbf16>, vector<2x128xf32> -> vector<2x128xf32>
    %223 = arith.addf %221, %222 : vector<2x128xf32>
    %224 = vector.broadcast %5 : vector<1x128xf32> to vector<2x128xf32>
    %225 = arith.addf %223, %224 : vector<2x128xf32>
    %226 = vector.extract_strided_slice %220 {offsets = [0, 0], sizes = [2, 96], strides = [1, 1]} : vector<2x128xf32> to vector<2x96xf32>
    %227 = arith.negf %226 : vector<2x96xf32>
    %228 = math.exp %227 : vector<2x96xf32>
    %cst_55 = arith.constant 1.000000e+00 : f32
    %229 = vector.broadcast %cst_55 : f32 to vector<2x96xf32>
    %230 = arith.addf %229, %228 : vector<2x96xf32>
    %231 = arith.divf %229, %230 : vector<2x96xf32>
    %232 = vector.extract_strided_slice %220 {offsets = [0, 96], sizes = [2, 32], strides = [1, 1]} : vector<2x128xf32> to vector<2x32xf32>
    %233 = math.tanh %232 : vector<2x32xf32>
    %234 = vector.extract_strided_slice %231 {offsets = [0, 0], sizes = [2, 32], strides = [1, 1]} : vector<2x96xf32> to vector<2x32xf32>
    %235 = vector.extract_strided_slice %231 {offsets = [0, 32], sizes = [2, 32], strides = [1, 1]} : vector<2x96xf32> to vector<2x32xf32>
    %236 = vector.extract_strided_slice %231 {offsets = [0, 64], sizes = [2, 32], strides = [1, 1]} : vector<2x96xf32> to vector<2x32xf32>
    %237 = arith.mulf %235, %193 : vector<2x32xf32>
    %238 = arith.mulf %234, %233 : vector<2x32xf32>
    %239 = arith.addf %237, %238 : vector<2x32xf32>
    %240 = math.tanh %239 : vector<2x32xf32>
    %241 = arith.mulf %236, %240 : vector<2x32xf32>
    %242 = arith.truncf %241 : vector<2x32xf32> to vector<2x32xbf16>
    %243 = vector.extract_strided_slice %225 {offsets = [0, 0], sizes = [2, 96], strides = [1, 1]} : vector<2x128xf32> to vector<2x96xf32>
    %244 = arith.negf %243 : vector<2x96xf32>
    %245 = math.exp %244 : vector<2x96xf32>
    %cst_56 = arith.constant 1.000000e+00 : f32
    %246 = vector.broadcast %cst_56 : f32 to vector<2x96xf32>
    %247 = arith.addf %246, %245 : vector<2x96xf32>
    %248 = arith.divf %246, %247 : vector<2x96xf32>
    %249 = vector.extract_strided_slice %225 {offsets = [0, 96], sizes = [2, 32], strides = [1, 1]} : vector<2x128xf32> to vector<2x32xf32>
    %250 = math.tanh %249 : vector<2x32xf32>
    %251 = vector.extract_strided_slice %248 {offsets = [0, 0], sizes = [2, 32], strides = [1, 1]} : vector<2x96xf32> to vector<2x32xf32>
    %252 = vector.extract_strided_slice %248 {offsets = [0, 32], sizes = [2, 32], strides = [1, 1]} : vector<2x96xf32> to vector<2x32xf32>
    %253 = vector.extract_strided_slice %248 {offsets = [0, 64], sizes = [2, 32], strides = [1, 1]} : vector<2x96xf32> to vector<2x32xf32>
    %254 = arith.mulf %252, %210 : vector<2x32xf32>
    %255 = arith.mulf %251, %250 : vector<2x32xf32>
    %256 = arith.addf %254, %255 : vector<2x32xf32>
    %257 = math.tanh %256 : vector<2x32xf32>
    %258 = arith.mulf %253, %257 : vector<2x32xf32>
    %259 = arith.truncf %258 : vector<2x32xf32> to vector<2x32xbf16>
    %c6 = arith.constant 6 : index
    %c0_57 = arith.constant 0 : index
    %c0_58 = arith.constant 0 : index
    %260 = vector.load %arg1[%c6, %c0_57, %c0_58] : memref<8x2x16xbf16, #tpu.memory_space<vmem>>, vector<1x2x16xbf16>
    %261 = vector.shape_cast %260 : vector<1x2x16xbf16> to vector<2x16xbf16>
    %cst_59 = arith.constant dense<0.000000e+00> : vector<2x128xf32>
    %262 = tpu.matmul %261, %0, %cst_59 {dimension_numbers = #tpu.dot_dimension_numbers<[1], [0], [0], [1], [0, 0, 1, 1], [], []>} : vector<2x16xbf16>, vector<16x128xbf16>, vector<2x128xf32> -> vector<2x128xf32>
    %cst_60 = arith.constant dense<0.000000e+00> : vector<2x128xf32>
    %263 = tpu.matmul %242, %1, %cst_60 {dimension_numbers = #tpu.dot_dimension_numbers<[1], [0], [0], [1], [0, 0, 1, 1], [], []>} : vector<2x32xbf16>, vector<32x128xbf16>, vector<2x128xf32> -> vector<2x128xf32>
    %264 = arith.addf %262, %263 : vector<2x128xf32>
    %265 = vector.broadcast %2 : vector<1x128xf32> to vector<2x128xf32>
    %266 = arith.addf %264, %265 : vector<2x128xf32>
    %cst_61 = arith.constant dense<0.000000e+00> : vector<2x128xf32>
    %267 = tpu.matmul %242, %3, %cst_61 {dimension_numbers = #tpu.dot_dimension_numbers<[1], [0], [0], [1], [0, 0, 1, 1], [], []>} : vector<2x32xbf16>, vector<32x128xbf16>, vector<2x128xf32> -> vector<2x128xf32>
    %cst_62 = arith.constant dense<0.000000e+00> : vector<2x128xf32>
    %268 = tpu.matmul %259, %4, %cst_62 {dimension_numbers = #tpu.dot_dimension_numbers<[1], [0], [0], [1], [0, 0, 1, 1], [], []>} : vector<2x32xbf16>, vector<32x128xbf16>, vector<2x128xf32> -> vector<2x128xf32>
    %269 = arith.addf %267, %268 : vector<2x128xf32>
    %270 = vector.broadcast %5 : vector<1x128xf32> to vector<2x128xf32>
    %271 = arith.addf %269, %270 : vector<2x128xf32>
    %272 = vector.extract_strided_slice %266 {offsets = [0, 0], sizes = [2, 96], strides = [1, 1]} : vector<2x128xf32> to vector<2x96xf32>
    %273 = arith.negf %272 : vector<2x96xf32>
    %274 = math.exp %273 : vector<2x96xf32>
    %cst_63 = arith.constant 1.000000e+00 : f32
    %275 = vector.broadcast %cst_63 : f32 to vector<2x96xf32>
    %276 = arith.addf %275, %274 : vector<2x96xf32>
    %277 = arith.divf %275, %276 : vector<2x96xf32>
    %278 = vector.extract_strided_slice %266 {offsets = [0, 96], sizes = [2, 32], strides = [1, 1]} : vector<2x128xf32> to vector<2x32xf32>
    %279 = math.tanh %278 : vector<2x32xf32>
    %280 = vector.extract_strided_slice %277 {offsets = [0, 0], sizes = [2, 32], strides = [1, 1]} : vector<2x96xf32> to vector<2x32xf32>
    %281 = vector.extract_strided_slice %277 {offsets = [0, 32], sizes = [2, 32], strides = [1, 1]} : vector<2x96xf32> to vector<2x32xf32>
    %282 = vector.extract_strided_slice %277 {offsets = [0, 64], sizes = [2, 32], strides = [1, 1]} : vector<2x96xf32> to vector<2x32xf32>
    %283 = arith.mulf %281, %239 : vector<2x32xf32>
    %284 = arith.mulf %280, %279 : vector<2x32xf32>
    %285 = arith.addf %283, %284 : vector<2x32xf32>
    %286 = math.tanh %285 : vector<2x32xf32>
    %287 = arith.mulf %282, %286 : vector<2x32xf32>
    %288 = arith.truncf %287 : vector<2x32xf32> to vector<2x32xbf16>
    %289 = vector.extract_strided_slice %271 {offsets = [0, 0], sizes = [2, 96], strides = [1, 1]} : vector<2x128xf32> to vector<2x96xf32>
    %290 = arith.negf %289 : vector<2x96xf32>
    %291 = math.exp %290 : vector<2x96xf32>
    %cst_64 = arith.constant 1.000000e+00 : f32
    %292 = vector.broadcast %cst_64 : f32 to vector<2x96xf32>
    %293 = arith.addf %292, %291 : vector<2x96xf32>
    %294 = arith.divf %292, %293 : vector<2x96xf32>
    %295 = vector.extract_strided_slice %271 {offsets = [0, 96], sizes = [2, 32], strides = [1, 1]} : vector<2x128xf32> to vector<2x32xf32>
    %296 = math.tanh %295 : vector<2x32xf32>
    %297 = vector.extract_strided_slice %294 {offsets = [0, 0], sizes = [2, 32], strides = [1, 1]} : vector<2x96xf32> to vector<2x32xf32>
    %298 = vector.extract_strided_slice %294 {offsets = [0, 32], sizes = [2, 32], strides = [1, 1]} : vector<2x96xf32> to vector<2x32xf32>
    %299 = vector.extract_strided_slice %294 {offsets = [0, 64], sizes = [2, 32], strides = [1, 1]} : vector<2x96xf32> to vector<2x32xf32>
    %300 = arith.mulf %298, %256 : vector<2x32xf32>
    %301 = arith.mulf %297, %296 : vector<2x32xf32>
    %302 = arith.addf %300, %301 : vector<2x32xf32>
    %303 = math.tanh %302 : vector<2x32xf32>
    %304 = arith.mulf %299, %303 : vector<2x32xf32>
    %305 = arith.truncf %304 : vector<2x32xf32> to vector<2x32xbf16>
    %c7 = arith.constant 7 : index
    %c0_65 = arith.constant 0 : index
    %c0_66 = arith.constant 0 : index
    %306 = vector.load %arg1[%c7, %c0_65, %c0_66] : memref<8x2x16xbf16, #tpu.memory_space<vmem>>, vector<1x2x16xbf16>
    %307 = vector.shape_cast %306 : vector<1x2x16xbf16> to vector<2x16xbf16>
    %cst_67 = arith.constant dense<0.000000e+00> : vector<2x128xf32>
    %308 = tpu.matmul %307, %0, %cst_67 {dimension_numbers = #tpu.dot_dimension_numbers<[1], [0], [0], [1], [0, 0, 1, 1], [], []>} : vector<2x16xbf16>, vector<16x128xbf16>, vector<2x128xf32> -> vector<2x128xf32>
    %cst_68 = arith.constant dense<0.000000e+00> : vector<2x128xf32>
    %309 = tpu.matmul %288, %1, %cst_68 {dimension_numbers = #tpu.dot_dimension_numbers<[1], [0], [0], [1], [0, 0, 1, 1], [], []>} : vector<2x32xbf16>, vector<32x128xbf16>, vector<2x128xf32> -> vector<2x128xf32>
    %310 = arith.addf %308, %309 : vector<2x128xf32>
    %311 = vector.broadcast %2 : vector<1x128xf32> to vector<2x128xf32>
    %312 = arith.addf %310, %311 : vector<2x128xf32>
    %cst_69 = arith.constant dense<0.000000e+00> : vector<2x128xf32>
    %313 = tpu.matmul %288, %3, %cst_69 {dimension_numbers = #tpu.dot_dimension_numbers<[1], [0], [0], [1], [0, 0, 1, 1], [], []>} : vector<2x32xbf16>, vector<32x128xbf16>, vector<2x128xf32> -> vector<2x128xf32>
    %cst_70 = arith.constant dense<0.000000e+00> : vector<2x128xf32>
    %314 = tpu.matmul %305, %4, %cst_70 {dimension_numbers = #tpu.dot_dimension_numbers<[1], [0], [0], [1], [0, 0, 1, 1], [], []>} : vector<2x32xbf16>, vector<32x128xbf16>, vector<2x128xf32> -> vector<2x128xf32>
    %315 = arith.addf %313, %314 : vector<2x128xf32>
    %316 = vector.broadcast %5 : vector<1x128xf32> to vector<2x128xf32>
    %317 = arith.addf %315, %316 : vector<2x128xf32>
    %318 = vector.extract_strided_slice %312 {offsets = [0, 0], sizes = [2, 96], strides = [1, 1]} : vector<2x128xf32> to vector<2x96xf32>
    %319 = arith.negf %318 : vector<2x96xf32>
    %320 = math.exp %319 : vector<2x96xf32>
    %cst_71 = arith.constant 1.000000e+00 : f32
    %321 = vector.broadcast %cst_71 : f32 to vector<2x96xf32>
    %322 = arith.addf %321, %320 : vector<2x96xf32>
    %323 = arith.divf %321, %322 : vector<2x96xf32>
    %324 = vector.extract_strided_slice %312 {offsets = [0, 96], sizes = [2, 32], strides = [1, 1]} : vector<2x128xf32> to vector<2x32xf32>
    %325 = math.tanh %324 : vector<2x32xf32>
    %326 = vector.extract_strided_slice %323 {offsets = [0, 0], sizes = [2, 32], strides = [1, 1]} : vector<2x96xf32> to vector<2x32xf32>
    %327 = vector.extract_strided_slice %323 {offsets = [0, 32], sizes = [2, 32], strides = [1, 1]} : vector<2x96xf32> to vector<2x32xf32>
    %328 = vector.extract_strided_slice %323 {offsets = [0, 64], sizes = [2, 32], strides = [1, 1]} : vector<2x96xf32> to vector<2x32xf32>
    %329 = arith.mulf %327, %285 : vector<2x32xf32>
    %330 = arith.mulf %326, %325 : vector<2x32xf32>
    %331 = arith.addf %329, %330 : vector<2x32xf32>
    %332 = math.tanh %331 : vector<2x32xf32>
    %333 = arith.mulf %328, %332 : vector<2x32xf32>
    %334 = arith.truncf %333 : vector<2x32xf32> to vector<2x32xbf16>
    %335 = vector.extract_strided_slice %317 {offsets = [0, 0], sizes = [2, 96], strides = [1, 1]} : vector<2x128xf32> to vector<2x96xf32>
    %336 = arith.negf %335 : vector<2x96xf32>
    %337 = math.exp %336 : vector<2x96xf32>
    %cst_72 = arith.constant 1.000000e+00 : f32
    %338 = vector.broadcast %cst_72 : f32 to vector<2x96xf32>
    %339 = arith.addf %338, %337 : vector<2x96xf32>
    %340 = arith.divf %338, %339 : vector<2x96xf32>
    %341 = vector.extract_strided_slice %317 {offsets = [0, 96], sizes = [2, 32], strides = [1, 1]} : vector<2x128xf32> to vector<2x32xf32>
    %342 = math.tanh %341 : vector<2x32xf32>
    %343 = vector.extract_strided_slice %340 {offsets = [0, 0], sizes = [2, 32], strides = [1, 1]} : vector<2x96xf32> to vector<2x32xf32>
    %344 = vector.extract_strided_slice %340 {offsets = [0, 32], sizes = [2, 32], strides = [1, 1]} : vector<2x96xf32> to vector<2x32xf32>
    %345 = vector.extract_strided_slice %340 {offsets = [0, 64], sizes = [2, 32], strides = [1, 1]} : vector<2x96xf32> to vector<2x32xf32>
    %346 = arith.mulf %344, %302 : vector<2x32xf32>
    %347 = arith.mulf %343, %342 : vector<2x32xf32>
    %348 = arith.addf %346, %347 : vector<2x32xf32>
    %349 = math.tanh %348 : vector<2x32xf32>
    %350 = arith.mulf %345, %349 : vector<2x32xf32>
    %351 = arith.truncf %350 : vector<2x32xf32> to vector<2x32xbf16>
    %cst_73 = arith.constant dense<0.000000e+00> : vector<2x128xf32>
    %352 = tpu.matmul %334, %3, %cst_73 {dimension_numbers = #tpu.dot_dimension_numbers<[1], [0], [0], [1], [0, 0, 1, 1], [], []>} : vector<2x32xbf16>, vector<32x128xbf16>, vector<2x128xf32> -> vector<2x128xf32>
    %cst_74 = arith.constant dense<0.000000e+00> : vector<2x128xf32>
    %353 = tpu.matmul %351, %4, %cst_74 {dimension_numbers = #tpu.dot_dimension_numbers<[1], [0], [0], [1], [0, 0, 1, 1], [], []>} : vector<2x32xbf16>, vector<32x128xbf16>, vector<2x128xf32> -> vector<2x128xf32>
    %354 = arith.addf %352, %353 : vector<2x128xf32>
    %355 = vector.broadcast %5 : vector<1x128xf32> to vector<2x128xf32>
    %356 = arith.addf %354, %355 : vector<2x128xf32>
    %357 = vector.extract_strided_slice %356 {offsets = [0, 0], sizes = [2, 96], strides = [1, 1]} : vector<2x128xf32> to vector<2x96xf32>
    %358 = arith.negf %357 : vector<2x96xf32>
    %359 = math.exp %358 : vector<2x96xf32>
    %cst_75 = arith.constant 1.000000e+00 : f32
    %360 = vector.broadcast %cst_75 : f32 to vector<2x96xf32>
    %361 = arith.addf %360, %359 : vector<2x96xf32>
    %362 = arith.divf %360, %361 : vector<2x96xf32>
    %363 = vector.extract_strided_slice %356 {offsets = [0, 96], sizes = [2, 32], strides = [1, 1]} : vector<2x128xf32> to vector<2x32xf32>
    %364 = math.tanh %363 : vector<2x32xf32>
    %365 = vector.extract_strided_slice %362 {offsets = [0, 0], sizes = [2, 32], strides = [1, 1]} : vector<2x96xf32> to vector<2x32xf32>
    %366 = vector.extract_strided_slice %362 {offsets = [0, 32], sizes = [2, 32], strides = [1, 1]} : vector<2x96xf32> to vector<2x32xf32>
    %367 = vector.extract_strided_slice %362 {offsets = [0, 64], sizes = [2, 32], strides = [1, 1]} : vector<2x96xf32> to vector<2x32xf32>
    %368 = arith.mulf %366, %348 : vector<2x32xf32>
    %369 = arith.mulf %365, %364 : vector<2x32xf32>
    %370 = arith.addf %368, %369 : vector<2x32xf32>
    %371 = math.tanh %370 : vector<2x32xf32>
    %372 = arith.mulf %367, %371 : vector<2x32xf32>
    %373 = arith.truncf %372 : vector<2x32xf32> to vector<2x32xbf16>
    %c0_76 = arith.constant 0 : index
    %c0_77 = arith.constant 0 : index
    %374 = vector.load %arg8[%c0_76, %c0_77] : memref<32x8xbf16, #tpu.memory_space<vmem>>, vector<32x8xbf16>
    %cst_78 = arith.constant dense<0.000000e+00> : vector<2x8xf32>
    %375 = tpu.matmul %373, %374, %cst_78 {dimension_numbers = #tpu.dot_dimension_numbers<[1], [0], [0], [1], [0, 0, 1, 1], [], []>} : vector<2x32xbf16>, vector<32x8xbf16>, vector<2x8xf32> -> vector<2x8xf32>
    %c0_79 = arith.constant 0 : index
    %c0_80 = arith.constant 0 : index
    %376 = vector.load %arg9[%c0_79, %c0_80] : memref<1x8xf32, #tpu.memory_space<vmem>>, vector<1x8xf32>
    %377 = vector.broadcast %376 : vector<1x8xf32> to vector<2x8xf32>
    %378 = arith.addf %375, %377 : vector<2x8xf32>
    %cst_81 = arith.constant 0.000000e+00 : f32
    %379 = vector.broadcast %cst_81 : f32 to vector<2x8xf32>
    %380 = arith.maximumf %378, %379 : vector<2x8xf32>
    %381 = arith.truncf %380 : vector<2x8xf32> to vector<2x8xbf16>
    %c0_82 = arith.constant 0 : index
    %c0_83 = arith.constant 0 : index
    %382 = vector.load %arg10[%c0_82, %c0_83] : memref<8x128xbf16, #tpu.memory_space<vmem>>, vector<8x128xbf16>
    %cst_84 = arith.constant dense<0.000000e+00> : vector<2x128xf32>
    %383 = tpu.matmul %381, %382, %cst_84 {dimension_numbers = #tpu.dot_dimension_numbers<[1], [0], [0], [1], [0, 0, 1, 1], [], []>} : vector<2x8xbf16>, vector<8x128xbf16>, vector<2x128xf32> -> vector<2x128xf32>
    %c0_85 = arith.constant 0 : index
    %c0_86 = arith.constant 0 : index
    %384 = vector.load %arg11[%c0_85, %c0_86] : memref<1x128xf32, #tpu.memory_space<vmem>>, vector<1x128xf32>
    %385 = vector.broadcast %384 : vector<1x128xf32> to vector<2x128xf32>
    %386 = arith.addf %383, %385 : vector<2x128xf32>
    %c0_87 = arith.constant 0 : index
    %c0_88 = arith.constant 0 : index
    %387 = vector.load %arg12[%c0_87, %c0_88] : memref<2x128xf32, #tpu.memory_space<vmem>>, vector<2x128xf32>
    tpu.vector_store %arg12[%c0_87, %c0_88], %386 {strides = array<i32>} : memref<2x128xf32, #tpu.memory_space<vmem>>, vector<2x128xf32>,
    return
  }
  func.func @transform_0(%arg0: i32) -> (i32, i32, i32) {
    %c0_i32 = arith.constant 0 : i32
    %c0_i32_0 = arith.constant 0 : i32
    %c0_i32_1 = arith.constant 0 : i32
    return %c0_i32, %arg0, %c0_i32_0 : i32, i32, i32
  }
  func.func @transform_1(%arg0: i32) -> (i32, i32) {
    %c0_i32 = arith.constant 0 : i32
    %c0_i32_0 = arith.constant 0 : i32
    %c0_i32_1 = arith.constant 0 : i32
    return %c0_i32, %c0_i32_0 : i32, i32
  }
  func.func @transform_2(%arg0: i32) -> (i32, i32) {
    %c0_i32 = arith.constant 0 : i32
    %c0_i32_0 = arith.constant 0 : i32
    %c0_i32_1 = arith.constant 0 : i32
    return %c0_i32, %c0_i32_0 : i32, i32
  }
  func.func @transform_3(%arg0: i32) -> (i32, i32) {
    %c0_i32 = arith.constant 0 : i32
    %c0_i32_0 = arith.constant 0 : i32
    %c0_i32_1 = arith.constant 0 : i32
    return %c0_i32, %c0_i32_0 : i32, i32
  }
  func.func @transform_4(%arg0: i32) -> (i32, i32) {
    %c0_i32 = arith.constant 0 : i32
    %c0_i32_0 = arith.constant 0 : i32
    %c0_i32_1 = arith.constant 0 : i32
    return %c0_i32, %c0_i32_0 : i32, i32
  }
  func.func @transform_5(%arg0: i32) -> (i32, i32) {
    %c0_i32 = arith.constant 0 : i32
    %c0_i32_0 = arith.constant 0 : i32
    %c0_i32_1 = arith.constant 0 : i32
    return %c0_i32, %c0_i32_0 : i32, i32
  }
  func.func @transform_6(%arg0: i32) -> (i32, i32) {
    %c0_i32 = arith.constant 0 : i32
    %c0_i32_0 = arith.constant 0 : i32
    %c0_i32_1 = arith.constant 0 : i32
    return %c0_i32, %c0_i32_0 : i32, i32
  }
  func.func @transform_7(%arg0: i32) -> (i32, i32) {
    %c0_i32 = arith.constant 0 : i32
    %c0_i32_0 = arith.constant 0 : i32
    %c0_i32_1 = arith.constant 0 : i32
    return %c0_i32, %c0_i32_0 : i32, i32
  }
  func.func @transform_8(%arg0: i32) -> (i32, i32) {
    %c0_i32 = arith.constant 0 : i32
    %c0_i32_0 = arith.constant 0 : i32
    %c0_i32_1 = arith.constant 0 : i32
    return %c0_i32, %c0_i32_0 : i32, i32
  }
  func.func @transform_9(%arg0: i32) -> (i32, i32) {
    %c0_i32 = arith.constant 0 : i32
    %c0_i32_0 = arith.constant 0 : i32
    %c0_i32_1 = arith.constant 0 : i32
    return %c0_i32, %c0_i32_0 : i32, i32
  }
  func.func @transform_10(%arg0: i32) -> (i32, i32) {
    %c0_i32 = arith.constant 0 : i32
    %c0_i32_0 = arith.constant 0 : i32
    %c0_i32_1 = arith.constant 0 : i32
    return %c0_i32, %c0_i32_0 : i32, i32
  }
  func.func @transform_11(%arg0: i32) -> (i32, i32) {
    %c0_i32 = arith.constant 0 : i32
    %c0_i32_0 = arith.constant 0 : i32
    return %arg0, %c0_i32 : i32, i32
  }
}

</mosaic_0001>

<llo_original>
// kernel: classificator_forward.1
$region0: #{classificator_forward.1}
  #allocation0 [shape = 'u32[]', space=smem, size = 0x4, offset = 0x4, fixed_abs, tag = 'smem constant byte address 0x4 - core index']
  #allocation1 [shape = 'u32[144,128]{1,0:T(1,128)}', space=vmem, size = 0x12000, scoped, tag = 'internal scratch']
  %s0 = inlined_call_operand.vmem [shape: bf16[8,2,16], index: 0, kind: input, shape index: {}]
  %s1 = inlined_call_operand.vmem [shape: bf16[16,128], index: 1, kind: input, shape index: {}]
  %s2 = inlined_call_operand.vmem [shape: bf16[32,128], index: 2, kind: input, shape index: {}]
  %s3 = inlined_call_operand.vmem [shape: f32[1,128], index: 3, kind: input, shape index: {}]
  %s4 = inlined_call_operand.vmem [shape: bf16[32,128], index: 4, kind: input, shape index: {}]
  %s5 = inlined_call_operand.vmem [shape: bf16[32,128], index: 5, kind: input, shape index: {}]
  %s6 = inlined_call_operand.vmem [shape: f32[1,128], index: 6, kind: input, shape index: {}]
  %s7 = inlined_call_operand.vmem [shape: bf16[32,8], index: 7, kind: input, shape index: {}]
  %s8 = inlined_call_operand.vmem [shape: f32[1,8], index: 8, kind: input, shape index: {}]
  %s9 = inlined_call_operand.vmem [shape: bf16[8,128], index: 9, kind: input, shape index: {}]
  %s10 = inlined_call_operand.vmem [shape: f32[1,128], index: 10, kind: input, shape index: {}]
  %s11 = inlined_call_operand.hbm [shape: f32[2,128], index: 11, kind: output, shape index: {}]
  %s12 = sld [smem:[#allocation0]]
  $region54: #{classificator_forward.1} parent=0
    _
  %s14 = ssub.s32 1, %s12
  %s15 = scalar_select 0, %s14, %s12
  $region1: #{classificator_forward.1} parent=0
    #allocation2 [shape = 'u8[1024]{0}', space=vmem, size = 0x400, scoped, tag = 'output window, operand 0, single buffered']
    #allocation3 [shape = 's32[1]{0}', space=sflag, size = 0x4, scoped, tag = 'scoped memory for classificator_forward.1']
    %16 = vsyncpa [#allocation3], 0
    // Predicated region
    $region2: #{classificator_forward.1} parent=1 // pred_check
      _
    $region3: #{classificator_forward.1} parent=1 // pred_check_branch
      %18 = sbr.rel (0) target = $region5
    $region4: #{classificator_forward.1} parent=1 // pred_region
      _
    $region5: #{classificator_forward.1} parent=1 // pred_fallthru
      _
    // Predicated region
    $region6: #{classificator_forward.1} parent=1 // pred_check
      _
    $region7: #{classificator_forward.1} parent=1 // pred_check_branch
      %20 = sbr.rel (0) target = $region9
    $region8: #{classificator_forward.1} parent=1 // pred_region
      _
    $region9: #{classificator_forward.1} parent=1 // pred_fallthru
      _
    // Predicated region
    $region10: #{classificator_forward.1} parent=1 // pred_check
      _
    $region11: #{classificator_forward.1} parent=1 // pred_check_branch
      %22 = sbr.rel (0) target = $region13
    $region12: #{classificator_forward.1} parent=1 // pred_region
      _
    $region13: #{classificator_forward.1} parent=1 // pred_fallthru
      _
    // Predicated region
    $region14: #{classificator_forward.1} parent=1 // pred_check
      _
    $region15: #{classificator_forward.1} parent=1 // pred_check_branch
      %24 = sbr.rel (0) target = $region17
    $region16: #{classificator_forward.1} parent=1 // pred_region
      _
    $region17: #{classificator_forward.1} parent=1 // pred_fallthru
      _
    // Predicated region
    $region18: #{classificator_forward.1} parent=1 // pred_check
      _
    $region19: #{classificator_forward.1} parent=1 // pred_check_branch
      %26 = sbr.rel (0) target = $region21
    $region20: #{classificator_forward.1} parent=1 // pred_region
      _
    $region21: #{classificator_forward.1} parent=1 // pred_fallthru
      _
    // Predicated region
    $region22: #{classificator_forward.1} parent=1 // pred_check
      _
    $region23: #{classificator_forward.1} parent=1 // pred_check_branch
      %28 = sbr.rel (0) target = $region25
    $region24: #{classificator_forward.1} parent=1 // pred_region
      _
    $region25: #{classificator_forward.1} parent=1 // pred_fallthru
      _
    // Predicated region
    $region26: #{classificator_forward.1} parent=1 // pred_check
      _
    $region27: #{classificator_forward.1} parent=1 // pred_check_branch
      %30 = sbr.rel (0) target = $region29
    $region28: #{classificator_forward.1} parent=1 // pred_region
      _
    $region29: #{classificator_forward.1} parent=1 // pred_fallthru
      _
    // Predicated region
    $region30: #{classificator_forward.1} parent=1 // pred_check
      _
    $region31: #{classificator_forward.1} parent=1 // pred_check_branch
      %32 = sbr.rel (0) target = $region33
    $region32: #{classificator_forward.1} parent=1 // pred_region
      _
    $region33: #{classificator_forward.1} parent=1 // pred_fallthru
      _
    // Predicated region
    $region34: #{classificator_forward.1} parent=1 // pred_check
      _
    $region35: #{classificator_forward.1} parent=1 // pred_check_branch
      %34 = sbr.rel (0) target = $region37
    $region36: #{classificator_forward.1} parent=1 // pred_region
      _
    $region37: #{classificator_forward.1} parent=1 // pred_fallthru
      _
    // Predicated region
    $region38: #{classificator_forward.1} parent=1 // pred_check
      _
    $region39: #{classificator_forward.1} parent=1 // pred_check_branch
      %36 = sbr.rel (0) target = $region41
    $region40: #{classificator_forward.1} parent=1 // pred_region
      _
    $region41: #{classificator_forward.1} parent=1 // pred_fallthru
      _
    // Predicated region
    $region42: #{classificator_forward.1} parent=1 // pred_check
      _
    $region43: #{classificator_forward.1} parent=1 // pred_check_branch
      %38 = sbr.rel (0) target = $region45
    $region44: #{classificator_forward.1} parent=1 // pred_region
      _
    $region45: #{classificator_forward.1} parent=1 // pred_fallthru
      _
    %v40 = vld [vmem:[%s1] sm:$0xf]
    %v41 = vld [vmem:[%s1 + $0x4] sm:$0xf]
    %v42 = vld [vmem:[%s2] sm:$0xf]
    %v43 = vld [vmem:[%s2 + $0x4] sm:$0xf]
    %v44 = vld [vmem:[%s2 + $0x8] sm:$0xf]
    %v45 = vld [vmem:[%s2 + $0xc] sm:$0xf]
    %v46 = vld [vmem:[%s3] sm:$0x1]
    %v47 = vld [vmem:[%s4] sm:$0xf]
    %v48 = vld [vmem:[%s4 + $0x4] sm:$0xf]
    %v49 = vld [vmem:[%s4 + $0x8] sm:$0xf]
    %v50 = vld [vmem:[%s4 + $0xc] sm:$0xf]
    %v51 = vld [vmem:[%s5] sm:$0xf]
    %v52 = vld [vmem:[%s5 + $0x4] sm:$0xf]
    %v53 = vld [vmem:[%s5 + $0x8] sm:$0xf]
    %v54 = vld [vmem:[%s5 + $0xc] sm:$0xf]
    %v55 = vld [vmem:[%s6] sm:$0x1]
    %v56 = vld [vmem:[%s0] sm:$0x1]
    %v58 = vlaneseq
    %v59 = vshrl.u32 %v58, 7
    %v60 = vsub.s32 0, %v59
    %v61 = vrot.slane %v46, %v60
    %v65 = vunpack.c.l.b16 %v40
    %v66 = vunpack.c.l.b16 %v41
    %v67 = vpack.c.b16 %v66, %v65
    %vm69 = vcmask 130048
    %v71 = vsel %vm69, %v56, 0
    %73 = vmatprep.subr.bf16.mxu0 0
    %74 = vmatpush1.bf16.msra.mxu0 %v67
    %75 = vmatprep.subr.bf16.mxu0 0
    %76 = vmatpush1.bf16.msra.mxu0 0
    %77 = vmatprep.subr.bf16.mxu0 0
    %78 = vmatpush1.bf16.msra.mxu0 0
    %79 = vmatprep.subr.bf16.mxu0 0
    %80 = vmatpush1.bf16.msra.mxu0 0
    %81 = vmatprep.subr.bf16.mxu0 0
    %82 = vmatpush1.bf16.msra.mxu0 0
    %83 = vmatprep.subr.bf16.mxu0 0
    %84 = vmatpush1.bf16.msra.mxu0 0
    %85 = vmatprep.subr.bf16.mxu0 0
    %86 = vmatpush1.bf16.msra.mxu0 0
    %87 = vmatprep.subr.bf16.mxu0 0
    %88 = vmatpush1.bf16.msra.mxu0 0
    %89 = vmatprep.subr.bf16.mxu0 0
    %90 = vmatpush1.bf16.msra.mxu0 0
    %91 = vmatprep.subr.bf16.mxu0 0
    %92 = vmatpush1.bf16.msra.mxu0 0
    %93 = vmatprep.subr.bf16.mxu0 0
    %94 = vmatpush1.bf16.msra.mxu0 0
    %95 = vmatprep.subr.bf16.mxu0 0
    %96 = vmatpush1.bf16.msra.mxu0 0
    %97 = vmatprep.subr.bf16.mxu0 0
    %98 = vmatpush1.bf16.msra.mxu0 0
    %99 = vmatprep.subr.bf16.mxu0 0
    %100 = vmatpush1.bf16.msra.mxu0 0
    %101 = vmatprep.subr.bf16.mxu0 0
    %102 = vmatpush1.bf16.msra.mxu0 0
    %103 = vmatprep.subr.bf16.mxu0 0
    %104 = vmatpush1.bf16.msra.mxu0 0
    %105 = vmatprep.mubr.bf16.mxu0 0
    %106 = vmatmul.mubr.bf16.gmra.mrb[0].mxu0 %v71
    %v107 = vpop.f32.mrb[0].mxu0
    %v108 = vadd.f32 %v61, %v107
    %v109 = vpop.f32.mrb[0].mxu0
    %v110 = vpop.f32.mrb[0].mxu0
    %v111 = vpop.f32.mrb[0].mxu0
    %112 = vdwg.mxu0
    %v113 = vxor.u32 %v108, 2147483648
    %v114 = vmul.f32 %v113, 1.442695
    %v115 = vpow.pop %v114
    %v116 = vadd.f32 %v115, 1.0
    %v117 = vrcp.pop %v116
    %v118 = vmul.f32 1.0, %v117
    %v119 = vtanh.pop %v108
    %v120 = vmul.f32 %v118, 0.0
    %122 = vrot.lane.b32.xlu0 %v119, 32
    %v123 = vpop.permute.xlu0 %122
    %v125 = vmul.f32 %v118, %v123
    %127 = vrot.lane.b32.xlu0 %v125, 32
    %v128 = vpop.permute.xlu0 %127
    %v130 = vadd.f32 %v120, %v128
    %v131 = vtanh.pop %v130
    %133 = vrot.lane.b32.xlu0 %v131, 32
    %v134 = vpop.permute.xlu0 %133
    %v136 = vmul.f32 %v118, %v134
    %v137 = vpack.c.bf16 %v136, %v136
    %s138 = scalar_lea.vmem %s0, 1
    %v139 = vld [vmem:[%s138] sm:$0x1]
    %141 = vrot.lane.b32.xlu0 %v137, 64
    %v142 = vpop.permute.xlu0 %141
    %v147 = vunpack.c.l.b16 %v42
    %v148 = vunpack.c.l.b16 %v43
    %v149 = vunpack.c.l.b16 %v44
    %v150 = vunpack.c.l.b16 %v45
    %v151 = vpack.c.b16 %v148, %v147
    %v152 = vpack.c.b16 %v150, %v149
    %vm155 = vcmask 261120
    %v157 = vsel %vm155, %v142, 0
    %159 = vmatprep.subr.bf16.mxu0 0
    %160 = vmatpush1.bf16.msra.mxu0 %v151
    %161 = vmatprep.subr.bf16.mxu0 0
    %162 = vmatpush1.bf16.msra.mxu0 %v152
    %163 = vmatprep.subr.bf16.mxu0 0
    %164 = vmatpush1.bf16.msra.mxu0 0
    %165 = vmatprep.subr.bf16.mxu0 0
    %166 = vmatpush1.bf16.msra.mxu0 0
    %167 = vmatprep.subr.bf16.mxu0 0
    %168 = vmatpush1.bf16.msra.mxu0 0
    %169 = vmatprep.subr.bf16.mxu0 0
    %170 = vmatpush1.bf16.msra.mxu0 0
    %171 = vmatprep.subr.bf16.mxu0 0
    %172 = vmatpush1.bf16.msra.mxu0 0
    %173 = vmatprep.subr.bf16.mxu0 0
    %174 = vmatpush1.bf16.msra.mxu0 0
    %175 = vmatprep.subr.bf16.mxu0 0
    %176 = vmatpush1.bf16.msra.mxu0 0
    %177 = vmatprep.subr.bf16.mxu0 0
    %178 = vmatpush1.bf16.msra.mxu0 0
    %179 = vmatprep.subr.bf16.mxu0 0
    %180 = vmatpush1.bf16.msra.mxu0 0
    %181 = vmatprep.subr.bf16.mxu0 0
    %182 = vmatpush1.bf16.msra.mxu0 0
    %183 = vmatprep.subr.bf16.mxu0 0
    %184 = vmatpush1.bf16.msra.mxu0 0
    %185 = vmatprep.subr.bf16.mxu0 0
    %186 = vmatpush1.bf16.msra.mxu0 0
    %187 = vmatprep.subr.bf16.mxu0 0
    %188 = vmatpush1.bf16.msra.mxu0 0
    %189 = vmatprep.subr.bf16.mxu0 0
    %190 = vmatpush1.bf16.msra.mxu0 0
    %191 = vmatprep.mubr.bf16.mxu0 0
    %192 = vmatmul.mubr.bf16.gmra.mrb[0].mxu0 %v157
    %v193 = vpop.f32.mrb[0].mxu0
    %v194 = vadd.f32 0.0, %v193
    %v195 = vpop.f32.mrb[0].mxu0
    %v196 = vpop.f32.mrb[0].mxu0
    %v197 = vpop.f32.mrb[0].mxu0
    %198 = vdwg.mxu0
    %v200 = vsel %vm69, %v139, 0
    %202 = vmatprep.subr.bf16.mxu0 0
    %203 = vmatpush1.bf16.msra.mxu0 %v67
    %204 = vmatprep.subr.bf16.mxu0 0
    %205 = vmatpush1.bf16.msra.mxu0 0
    %206 = vmatprep.subr.bf16.mxu0 0
    %207 = vmatpush1.bf16.msra.mxu0 0
    %208 = vmatprep.subr.bf16.mxu0 0
    %209 = vmatpush1.bf16.msra.mxu0 0
    %210 = vmatprep.subr.bf16.mxu0 0
    %211 = vmatpush1.bf16.msra.mxu0 0
    %212 = vmatprep.subr.bf16.mxu0 0
    %213 = vmatpush1.bf16.msra.mxu0 0
    %214 = vmatprep.subr.bf16.mxu0 0
    %215 = vmatpush1.bf16.msra.mxu0 0
    %216 = vmatprep.subr.bf16.mxu0 0
    %217 = vmatpush1.bf16.msra.mxu0 0
    %218 = vmatprep.subr.bf16.mxu0 0
    %219 = vmatpush1.bf16.msra.mxu0 0
    %220 = vmatprep.subr.bf16.mxu0 0
    %221 = vmatpush1.bf16.msra.mxu0 0
    %222 = vmatprep.subr.bf16.mxu0 0
    %223 = vmatpush1.bf16.msra.mxu0 0
    %224 = vmatprep.subr.bf16.mxu0 0
    %225 = vmatpush1.bf16.msra.mxu0 0
    %226 = vmatprep.subr.bf16.mxu0 0
    %227 = vmatpush1.bf16.msra.mxu0 0
    %228 = vmatprep.subr.bf16.mxu0 0
    %229 = vmatpush1.bf16.msra.mxu0 0
    %230 = vmatprep.subr.bf16.mxu0 0
    %231 = vmatpush1.bf16.msra.mxu0 0
    %232 = vmatprep.subr.bf16.mxu0 0
    %233 = vmatpush1.bf16.msra.mxu0 0
    %234 = vmatprep.mubr.bf16.mxu0 0
    %235 = vmatmul.mubr.bf16.gmra.mrb[0].mxu0 %v200
    %v236 = vpop.f32.mrb[0].mxu0
    %v237 = vadd.f32 %v194, %v236
    %v238 = vpop.f32.mrb[0].mxu0
    %v239 = vpop.f32.mrb[0].mxu0
    %v240 = vpop.f32.mrb[0].mxu0
    %241 = vdwg.mxu0
    %v242 = vadd.f32 %v237, %v61
    %v247 = vunpack.c.l.b16 %v51
    %v248 = vunpack.c.l.b16 %v52
    %v249 = vunpack.c.l.b16 %v53
    %v250 = vunpack.c.l.b16 %v54
    %v251 = vpack.c.b16 %v248, %v247
    %v252 = vpack.c.b16 %v250, %v249
    %v256 = vsel %vm155, 0, 0
    %258 = vmatprep.subr.bf16.mxu0 0
    %259 = vmatpush1.bf16.msra.mxu0 %v251
    %260 = vmatprep.subr.bf16.mxu0 0
    %261 = vmatpush1.bf16.msra.mxu0 %v252
    %262 = vmatprep.subr.bf16.mxu0 0
    %263 = vmatpush1.bf16.msra.mxu0 0
    %264 = vmatprep.subr.bf16.mxu0 0
    %265 = vmatpush1.bf16.msra.mxu0 0
    %266 = vmatprep.subr.bf16.mxu0 0
    %267 = vmatpush1.bf16.msra.mxu0 0
    %268 = vmatprep.subr.bf16.mxu0 0
    %269 = vmatpush1.bf16.msra.mxu0 0
    %270 = vmatprep.subr.bf16.mxu0 0
    %271 = vmatpush1.bf16.msra.mxu0 0
    %272 = vmatprep.subr.bf16.mxu0 0
    %273 = vmatpush1.bf16.msra.mxu0 0
    %274 = vmatprep.subr.bf16.mxu0 0
    %275 = vmatpush1.bf16.msra.mxu0 0
    %276 = vmatprep.subr.bf16.mxu0 0
    %277 = vmatpush1.bf16.msra.mxu0 0
    %278 = vmatprep.subr.bf16.mxu0 0
    %279 = vmatpush1.bf16.msra.mxu0 0
    %280 = vmatprep.subr.bf16.mxu0 0
    %281 = vmatpush1.bf16.msra.mxu0 0
    %282 = vmatprep.subr.bf16.mxu0 0
    %283 = vmatpush1.bf16.msra.mxu0 0
    %284 = vmatprep.subr.bf16.mxu0 0
    %285 = vmatpush1.bf16.msra.mxu0 0
    %286 = vmatprep.subr.bf16.mxu0 0
    %287 = vmatpush1.bf16.msra.mxu0 0
    %288 = vmatprep.subr.bf16.mxu0 0
    %289 = vmatpush1.bf16.msra.mxu0 0
    %290 = vmatprep.mubr.bf16.mxu0 0
    %291 = vmatmul.mubr.bf16.gmra.mrb[0].mxu0 %v256
    %v292 = vpop.f32.mrb[0].mxu0
    %v293 = vadd.f32 0.0, %v292
    %v294 = vpop.f32.mrb[0].mxu0
    %v295 = vpop.f32.mrb[0].mxu0
    %v296 = vpop.f32.mrb[0].mxu0
    %297 = vdwg.mxu0
    %v302 = vunpack.c.l.b16 %v47
    %v303 = vunpack.c.l.b16 %v48
    %v304 = vunpack.c.l.b16 %v49
    %v305 = vunpack.c.l.b16 %v50
    %v306 = vpack.c.b16 %v303, %v302
    %v307 = vpack.c.b16 %v305, %v304
    %310 = vmatprep.subr.bf16.mxu0 0
    %311 = vmatpush1.bf16.msra.mxu0 %v306
    %312 = vmatprep.subr.bf16.mxu0 0
    %313 = vmatpush1.bf16.msra.mxu0 %v307
    %314 = vmatprep.subr.bf16.mxu0 0
    %315 = vmatpush1.bf16.msra.mxu0 0
    %316 = vmatprep.subr.bf16.mxu0 0
    %317 = vmatpush1.bf16.msra.mxu0 0
    %318 = vmatprep.subr.bf16.mxu0 0
    %319 = vmatpush1.bf16.msra.mxu0 0
    %320 = vmatprep.subr.bf16.mxu0 0
    %321 = vmatpush1.bf16.msra.mxu0 0
    %322 = vmatprep.subr.bf16.mxu0 0
    %323 = vmatpush1.bf16.msra.mxu0 0
    %324 = vmatprep.subr.bf16.mxu0 0
    %325 = vmatpush1.bf16.msra.mxu0 0
    %326 = vmatprep.subr.bf16.mxu0 0
    %327 = vmatpush1.bf16.msra.mxu0 0
    %328 = vmatprep.subr.bf16.mxu0 0
    %329 = vmatpush1.bf16.msra.mxu0 0
    %330 = vmatprep.subr.bf16.mxu0 0
    %331 = vmatpush1.bf16.msra.mxu0 0
    %332 = vmatprep.subr.bf16.mxu0 0
    %333 = vmatpush1.bf16.msra.mxu0 0
    %334 = vmatprep.subr.bf16.mxu0 0
    %335 = vmatpush1.bf16.msra.mxu0 0
    %336 = vmatprep.subr.bf16.mxu0 0
    %337 = vmatpush1.bf16.msra.mxu0 0
    %338 = vmatprep.subr.bf16.mxu0 0
    %339 = vmatpush1.bf16.msra.mxu0 0
    %340 = vmatprep.subr.bf16.mxu0 0
    %341 = vmatpush1.bf16.msra.mxu0 0
    %342 = vmatprep.mubr.bf16.mxu0 0
    %343 = vmatmul.mubr.bf16.gmra.mrb[0].mxu0 %v157
    %v344 = vpop.f32.mrb[0].mxu0
    %v345 = vadd.f32 %v293, %v344
    %v346 = vpop.f32.mrb[0].mxu0
    %v347 = vpop.f32.mrb[0].mxu0
    %v348 = vpop.f32.mrb[0].mxu0
    %349 = vdwg.mxu0
    %v351 = vlaneseq
    %v352 = vshrl.u32 %v351, 7
    %v353 = vsub.s32 0, %v352
    %v354 = vrot.slane %v55, %v353
    %v356 = vadd.f32 %v345, %v354
    %v357 = vxor.u32 %v242, 2147483648
    %v358 = vmul.f32 %v357, 1.442695
    %v359 = vpow.pop %v358
    %v360 = vadd.f32 %v359, 1.0
    %v361 = vrcp.pop %v360
    %v362 = vmul.f32 1.0, %v361
    %v363 = vtanh.pop %v242
    %v364 = vmul.f32 %v362, %v130
    %366 = vrot.lane.b32.xlu0 %v363, 32
    %v367 = vpop.permute.xlu0 %366
    %v369 = vmul.f32 %v362, %v367
    %371 = vrot.lane.b32.xlu0 %v369, 32
    %v372 = vpop.permute.xlu0 %371
    %v374 = vadd.f32 %v364, %v372
    %v375 = vtanh.pop %v374
    %377 = vrot.lane.b32.xlu0 %v375, 32
    %v378 = vpop.permute.xlu0 %377
    %v380 = vmul.f32 %v362, %v378
    %v381 = vpack.c.bf16 %v380, %v380
    %v382 = vxor.u32 %v356, 2147483648
    %v383 = vmul.f32 %v382, 1.442695
    %v384 = vpow.pop %v383
    %v385 = vadd.f32 %v384, 1.0
    %v386 = vrcp.pop %v385
    %v387 = vmul.f32 1.0, %v386
    %v388 = vtanh.pop %v356
    %v389 = vmul.f32 %v387, 0.0
    %391 = vrot.lane.b32.xlu0 %v388, 32
    %v392 = vpop.permute.xlu0 %391
    %v394 = vmul.f32 %v387, %v392
    %396 = vrot.lane.b32.xlu0 %v394, 32
    %v397 = vpop.permute.xlu0 %396
    %v399 = vadd.f32 %v389, %v397
    %v400 = vtanh.pop %v399
    %402 = vrot.lane.b32.xlu0 %v400, 32
    %v403 = vpop.permute.xlu0 %402
    %v405 = vmul.f32 %v387, %v403
    %v406 = vpack.c.bf16 %v405, %v405
    %s407 = scalar_lea.vmem %s0, 2
    %v408 = vld [vmem:[%s407] sm:$0x1]
    %410 = vrot.lane.b32.xlu0 %v381, 64
    %v411 = vpop.permute.xlu0 %410
    %v413 = vsel %vm155, %v411, 0
    %415 = vmatprep.subr.bf16.mxu0 0
    %416 = vmatpush1.bf16.msra.mxu0 %v151
    %417 = vmatprep.subr.bf16.mxu0 0
    %418 = vmatpush1.bf16.msra.mxu0 %v152
    %419 = vmatprep.subr.bf16.mxu0 0
    %420 = vmatpush1.bf16.msra.mxu0 0
    %421 = vmatprep.subr.bf16.mxu0 0
    %422 = vmatpush1.bf16.msra.mxu0 0
    %423 = vmatprep.subr.bf16.mxu0 0
    %424 = vmatpush1.bf16.msra.mxu0 0
    %425 = vmatprep.subr.bf16.mxu0 0
    %426 = vmatpush1.bf16.msra.mxu0 0
    %427 = vmatprep.subr.bf16.mxu0 0
    %428 = vmatpush1.bf16.msra.mxu0 0
    %429 = vmatprep.subr.bf16.mxu0 0
    %430 = vmatpush1.bf16.msra.mxu0 0
    %431 = vmatprep.subr.bf16.mxu0 0
    %432 = vmatpush1.bf16.msra.mxu0 0
    %433 = vmatprep.subr.bf16.mxu0 0
    %434 = vmatpush1.bf16.msra.mxu0 0
    %435 = vmatprep.subr.bf16.mxu0 0
    %436 = vmatpush1.bf16.msra.mxu0 0
    %437 = vmatprep.subr.bf16.mxu0 0
    %438 = vmatpush1.bf16.msra.mxu0 0
    %439 = vmatprep.subr.bf16.mxu0 0
    %440 = vmatpush1.bf16.msra.mxu0 0
    %441 = vmatprep.subr.bf16.mxu0 0
    %442 = vmatpush1.bf16.msra.mxu0 0
    %443 = vmatprep.subr.bf16.mxu0 0
    %444 = vmatpush1.bf16.msra.mxu0 0
    %445 = vmatprep.subr.bf16.mxu0 0
    %446 = vmatpush1.bf16.msra.mxu0 0
    %447 = vmatprep.mubr.bf16.mxu0 0
    %448 = vmatmul.mubr.bf16.gmra.mrb[0].mxu0 %v413
    %v449 = vpop.f32.mrb[0].mxu0
    %v450 = vadd.f32 0.0, %v449
    %v451 = vpop.f32.mrb[0].mxu0
    %v452 = vpop.f32.mrb[0].mxu0
    %v453 = vpop.f32.mrb[0].mxu0
    %454 = vdwg.mxu0
    %v456 = vsel %vm69, %v408, 0
    %458 = vmatprep.subr.bf16.mxu0 0
    %459 = vmatpush1.bf16.msra.mxu0 %v67
    %460 = vmatprep.subr.bf16.mxu0 0
    %461 = vmatpush1.bf16.msra.mxu0 0
    %462 = vmatprep.subr.bf16.mxu0 0
    %463 = vmatpush1.bf16.msra.mxu0 0
    %464 = vmatprep.subr.bf16.mxu0 0
    %465 = vmatpush1.bf16.msra.mxu0 0
    %466 = vmatprep.subr.bf16.mxu0 0
    %467 = vmatpush1.bf16.msra.mxu0 0
    %468 = vmatprep.subr.bf16.mxu0 0
    %469 = vmatpush1.bf16.msra.mxu0 0
    %470 = vmatprep.subr.bf16.mxu0 0
    %471 = vmatpush1.bf16.msra.mxu0 0
    %472 = vmatprep.subr.bf16.mxu0 0
    %473 = vmatpush1.bf16.msra.mxu0 0
    %474 = vmatprep.subr.bf16.mxu0 0
    %475 = vmatpush1.bf16.msra.mxu0 0
    %476 = vmatprep.subr.bf16.mxu0 0
    %477 = vmatpush1.bf16.msra.mxu0 0
    %478 = vmatprep.subr.bf16.mxu0 0
    %479 = vmatpush1.bf16.msra.mxu0 0
    %480 = vmatprep.subr.bf16.mxu0 0
    %481 = vmatpush1.bf16.msra.mxu0 0
    %482 = vmatprep.subr.bf16.mxu0 0
    %483 = vmatpush1.bf16.msra.mxu0 0
    %484 = vmatprep.subr.bf16.mxu0 0
    %485 = vmatpush1.bf16.msra.mxu0 0
    %486 = vmatprep.subr.bf16.mxu0 0
    %487 = vmatpush1.bf16.msra.mxu0 0
    %488 = vmatprep.subr.bf16.mxu0 0
    %489 = vmatpush1.bf16.msra.mxu0 0
    %490 = vmatprep.mubr.bf16.mxu0 0
    %491 = vmatmul.mubr.bf16.gmra.mrb[0].mxu0 %v456
    %v492 = vpop.f32.mrb[0].mxu0
    %v493 = vadd.f32 %v450, %v492
    %v494 = vpop.f32.mrb[0].mxu0
    %v495 = vpop.f32.mrb[0].mxu0
    %v496 = vpop.f32.mrb[0].mxu0
    %497 = vdwg.mxu0
    %v498 = vadd.f32 %v493, %v61
    %500 = vrot.lane.b32.xlu0 %v406, 64
    %v501 = vpop.permute.xlu0 %500
    %v503 = vsel %vm155, %v501, 0
    %505 = vmatprep.subr.bf16.mxu0 0
    %506 = vmatpush1.bf16.msra.mxu0 %v251
    %507 = vmatprep.subr.bf16.mxu0 0
    %508 = vmatpush1.bf16.msra.mxu0 %v252
    %509 = vmatprep.subr.bf16.mxu0 0
    %510 = vmatpush1.bf16.msra.mxu0 0
    %511 = vmatprep.subr.bf16.mxu0 0
    %512 = vmatpush1.bf16.msra.mxu0 0
    %513 = vmatprep.subr.bf16.mxu0 0
    %514 = vmatpush1.bf16.msra.mxu0 0
    %515 = vmatprep.subr.bf16.mxu0 0
    %516 = vmatpush1.bf16.msra.mxu0 0
    %517 = vmatprep.subr.bf16.mxu0 0
    %518 = vmatpush1.bf16.msra.mxu0 0
    %519 = vmatprep.subr.bf16.mxu0 0
    %520 = vmatpush1.bf16.msra.mxu0 0
    %521 = vmatprep.subr.bf16.mxu0 0
    %522 = vmatpush1.bf16.msra.mxu0 0
    %523 = vmatprep.subr.bf16.mxu0 0
    %524 = vmatpush1.bf16.msra.mxu0 0
    %525 = vmatprep.subr.bf16.mxu0 0
    %526 = vmatpush1.bf16.msra.mxu0 0
    %527 = vmatprep.subr.bf16.mxu0 0
    %528 = vmatpush1.bf16.msra.mxu0 0
    %529 = vmatprep.subr.bf16.mxu0 0
    %530 = vmatpush1.bf16.msra.mxu0 0
    %531 = vmatprep.subr.bf16.mxu0 0
    %532 = vmatpush1.bf16.msra.mxu0 0
    %533 = vmatprep.subr.bf16.mxu0 0
    %534 = vmatpush1.bf16.msra.mxu0 0
    %535 = vmatprep.subr.bf16.mxu0 0
    %536 = vmatpush1.bf16.msra.mxu0 0
    %537 = vmatprep.mubr.bf16.mxu0 0
    %538 = vmatmul.mubr.bf16.gmra.mrb[0].mxu0 %v503
    %v539 = vpop.f32.mrb[0].mxu0
    %v540 = vadd.f32 0.0, %v539
    %v541 = vpop.f32.mrb[0].mxu0
    %v542 = vpop.f32.mrb[0].mxu0
    %v543 = vpop.f32.mrb[0].mxu0
    %544 = vdwg.mxu0
    %545 = vmatprep.subr.bf16.mxu0 0
    %546 = vmatpush1.bf16.msra.mxu0 %v306
    %547 = vmatprep.subr.bf16.mxu0 0
    %548 = vmatpush1.bf16.msra.mxu0 %v307
    %549 = vmatprep.subr.bf16.mxu0 0
    %550 = vmatpush1.bf16.msra.mxu0 0
    %551 = vmatprep.subr.bf16.mxu0 0
    %552 = vmatpush1.bf16.msra.mxu0 0
    %553 = vmatprep.subr.bf16.mxu0 0
    %554 = vmatpush1.bf16.msra.mxu0 0
    %555 = vmatprep.subr.bf16.mxu0 0
    %556 = vmatpush1.bf16.msra.mxu0 0
    %557 = vmatprep.subr.bf16.mxu0 0
    %558 = vmatpush1.bf16.msra.mxu0 0
    %559 = vmatprep.subr.bf16.mxu0 0
    %560 = vmatpush1.bf16.msra.mxu0 0
    %561 = vmatprep.subr.bf16.mxu0 0
    %562 = vmatpush1.bf16.msra.mxu0 0
    %563 = vmatprep.subr.bf16.mxu0 0
    %564 = vmatpush1.bf16.msra.mxu0 0
    %565 = vmatprep.subr.bf16.mxu0 0
    %566 = vmatpush1.bf16.msra.mxu0 0
    %567 = vmatprep.subr.bf16.mxu0 0
    %568 = vmatpush1.bf16.msra.mxu0 0
    %569 = vmatprep.subr.bf16.mxu0 0
    %570 = vmatpush1.bf16.msra.mxu0 0
    %571 = vmatprep.subr.bf16.mxu0 0
    %572 = vmatpush1.bf16.msra.mxu0 0
    %573 = vmatprep.subr.bf16.mxu0 0
    %574 = vmatpush1.bf16.msra.mxu0 0
    %575 = vmatprep.subr.bf16.mxu0 0
    %576 = vmatpush1.bf16.msra.mxu0 0
    %577 = vmatprep.mubr.bf16.mxu0 0
    %578 = vmatmul.mubr.bf16.gmra.mrb[0].mxu0 %v413
    %v579 = vpop.f32.mrb[0].mxu0
    %v580 = vadd.f32 %v540, %v579
    %v581 = vpop.f32.mrb[0].mxu0
    %v582 = vpop.f32.mrb[0].mxu0
    %v583 = vpop.f32.mrb[0].mxu0
    %584 = vdwg.mxu0
    %v585 = vadd.f32 %v580, %v354
    %v586 = vxor.u32 %v498, 2147483648
    %v587 = vmul.f32 %v586, 1.442695
    %v588 = vpow.pop %v587
    %v589 = vadd.f32 %v588, 1.0
    %v590 = vrcp.pop %v589
    %v591 = vmul.f32 1.0, %v590
    %v592 = vtanh.pop %v498
    %v593 = vmul.f32 %v591, %v374
    %595 = vrot.lane.b32.xlu0 %v592, 32
    %v596 = vpop.permute.xlu0 %595
    %v598 = vmul.f32 %v591, %v596
    %600 = vrot.lane.b32.xlu0 %v598, 32
    %v601 = vpop.permute.xlu0 %600
    %v603 = vadd.f32 %v593, %v601
    %v604 = vtanh.pop %v603
    %606 = vrot.lane.b32.xlu0 %v604, 32
    %v607 = vpop.permute.xlu0 %606
    %v609 = vmul.f32 %v591, %v607
    %v610 = vpack.c.bf16 %v609, %v609
    %v611 = vxor.u32 %v585, 2147483648
    %v612 = vmul.f32 %v611, 1.442695
    %v613 = vpow.pop %v612
    %v614 = vadd.f32 %v613, 1.0
    %v615 = vrcp.pop %v614
    %v616 = vmul.f32 1.0, %v615
    %v617 = vtanh.pop %v585
    %v618 = vmul.f32 %v616, %v399
    %620 = vrot.lane.b32.xlu0 %v617, 32
    %v621 = vpop.permute.xlu0 %620
    %v623 = vmul.f32 %v616, %v621
    %625 = vrot.lane.b32.xlu0 %v623, 32
    %v626 = vpop.permute.xlu0 %625
    %v628 = vadd.f32 %v618, %v626
    %v629 = vtanh.pop %v628
    %631 = vrot.lane.b32.xlu0 %v629, 32
    %v632 = vpop.permute.xlu0 %631
    %v634 = vmul.f32 %v616, %v632
    %v635 = vpack.c.bf16 %v634, %v634
    %s636 = scalar_lea.vmem %s0, 3
    %v637 = vld [vmem:[%s636] sm:$0x1]
    %639 = vrot.lane.b32.xlu0 %v610, 64
    %v640 = vpop.permute.xlu0 %639
    %v642 = vsel %vm155, %v640, 0
    %644 = vmatprep.subr.bf16.mxu0 0
    %645 = vmatpush1.bf16.msra.mxu0 %v151
    %646 = vmatprep.subr.bf16.mxu0 0
    %647 = vmatpush1.bf16.msra.mxu0 %v152
    %648 = vmatprep.subr.bf16.mxu0 0
    %649 = vmatpush1.bf16.msra.mxu0 0
    %650 = vmatprep.subr.bf16.mxu0 0
    %651 = vmatpush1.bf16.msra.mxu0 0
    %652 = vmatprep.subr.bf16.mxu0 0
    %653 = vmatpush1.bf16.msra.mxu0 0
    %654 = vmatprep.subr.bf16.mxu0 0
    %655 = vmatpush1.bf16.msra.mxu0 0
    %656 = vmatprep.subr.bf16.mxu0 0
    %657 = vmatpush1.bf16.msra.mxu0 0
    %658 = vmatprep.subr.bf16.mxu0 0
    %659 = vmatpush1.bf16.msra.mxu0 0
    %660 = vmatprep.subr.bf16.mxu0 0
    %661 = vmatpush1.bf16.msra.mxu0 0
    %662 = vmatprep.subr.bf16.mxu0 0
    %663 = vmatpush1.bf16.msra.mxu0 0
    %664 = vmatprep.subr.bf16.mxu0 0
    %665 = vmatpush1.bf16.msra.mxu0 0
    %666 = vmatprep.subr.bf16.mxu0 0
    %667 = vmatpush1.bf16.msra.mxu0 0
    %668 = vmatprep.subr.bf16.mxu0 0
    %669 = vmatpush1.bf16.msra.mxu0 0
    %670 = vmatprep.subr.bf16.mxu0 0
    %671 = vmatpush1.bf16.msra.mxu0 0
    %672 = vmatprep.subr.bf16.mxu0 0
    %673 = vmatpush1.bf16.msra.mxu0 0
    %674 = vmatprep.subr.bf16.mxu0 0
    %675 = vmatpush1.bf16.msra.mxu0 0
    %676 = vmatprep.mubr.bf16.mxu0 0
    %677 = vmatmul.mubr.bf16.gmra.mrb[0].mxu0 %v642
    %v678 = vpop.f32.mrb[0].mxu0
    %v679 = vadd.f32 0.0, %v678
    %v680 = vpop.f32.mrb[0].mxu0
    %v681 = vpop.f32.mrb[0].mxu0
    %v682 = vpop.f32.mrb[0].mxu0
    %683 = vdwg.mxu0
    %v685 = vsel %vm69, %v637, 0
    %687 = vmatprep.subr.bf16.mxu0 0
    %688 = vmatpush1.bf16.msra.mxu0 %v67
    %689 = vmatprep.subr.bf16.mxu0 0
    %690 = vmatpush1.bf16.msra.mxu0 0
    %691 = vmatprep.subr.bf16.mxu0 0
    %692 = vmatpush1.bf16.msra.mxu0 0
    %693 = vmatprep.subr.bf16.mxu0 0
    %694 = vmatpush1.bf16.msra.mxu0 0
    %695 = vmatprep.subr.bf16.mxu0 0
    %696 = vmatpush1.bf16.msra.mxu0 0
    %697 = vmatprep.subr.bf16.mxu0 0
    %698 = vmatpush1.bf16.msra.mxu0 0
    %699 = vmatprep.subr.bf16.mxu0 0
    %700 = vmatpush1.bf16.msra.mxu0 0
    %701 = vmatprep.subr.bf16.mxu0 0
    %702 = vmatpush1.bf16.msra.mxu0 0
    %703 = vmatprep.subr.bf16.mxu0 0
    %704 = vmatpush1.bf16.msra.mxu0 0
    %705 = vmatprep.subr.bf16.mxu0 0
    %706 = vmatpush1.bf16.msra.mxu0 0
    %707 = vmatprep.subr.bf16.mxu0 0
    %708 = vmatpush1.bf16.msra.mxu0 0
    %709 = vmatprep.subr.bf16.mxu0 0
    %710 = vmatpush1.bf16.msra.mxu0 0
    %711 = vmatprep.subr.bf16.mxu0 0
    %712 = vmatpush1.bf16.msra.mxu0 0
    %713 = vmatprep.subr.bf16.mxu0 0
    %714 = vmatpush1.bf16.msra.mxu0 0
    %715 = vmatprep.subr.bf16.mxu0 0
    %716 = vmatpush1.bf16.msra.mxu0 0
    %717 = vmatprep.subr.bf16.mxu0 0
    %718 = vmatpush1.bf16.msra.mxu0 0
    %719 = vmatprep.mubr.bf16.mxu0 0
    %720 = vmatmul.mubr.bf16.gmra.mrb[0].mxu0 %v685
    %v721 = vpop.f32.mrb[0].mxu0
    %v722 = vadd.f32 %v679, %v721
    %v723 = vpop.f32.mrb[0].mxu0
    %v724 = vpop.f32.mrb[0].mxu0
    %v725 = vpop.f32.mrb[0].mxu0
    %726 = vdwg.mxu0
    %v727 = vadd.f32 %v722, %v61
    %729 = vrot.lane.b32.xlu0 %v635, 64
    %v730 = vpop.permute.xlu0 %729
    %v732 = vsel %vm155, %v730, 0
    %734 = vmatprep.subr.bf16.mxu0 0
    %735 = vmatpush1.bf16.msra.mxu0 %v251
    %736 = vmatprep.subr.bf16.mxu0 0
    %737 = vmatpush1.bf16.msra.mxu0 %v252
    %738 = vmatprep.subr.bf16.mxu0 0
    %739 = vmatpush1.bf16.msra.mxu0 0
    %740 = vmatprep.subr.bf16.mxu0 0
    %741 = vmatpush1.bf16.msra.mxu0 0
    %742 = vmatprep.subr.bf16.mxu0 0
    %743 = vmatpush1.bf16.msra.mxu0 0
    %744 = vmatprep.subr.bf16.mxu0 0
    %745 = vmatpush1.bf16.msra.mxu0 0
    %746 = vmatprep.subr.bf16.mxu0 0
    %747 = vmatpush1.bf16.msra.mxu0 0
    %748 = vmatprep.subr.bf16.mxu0 0
    %749 = vmatpush1.bf16.msra.mxu0 0
    %750 = vmatprep.subr.bf16.mxu0 0
    %751 = vmatpush1.bf16.msra.mxu0 0
    %752 = vmatprep.subr.bf16.mxu0 0
    %753 = vmatpush1.bf16.msra.mxu0 0
    %754 = vmatprep.subr.bf16.mxu0 0
    %755 = vmatpush1.bf16.msra.mxu0 0
    %756 = vmatprep.subr.bf16.mxu0 0
    %757 = vmatpush1.bf16.msra.mxu0 0
    %758 = vmatprep.subr.bf16.mxu0 0
    %759 = vmatpush1.bf16.msra.mxu0 0
    %760 = vmatprep.subr.bf16.mxu0 0
    %761 = vmatpush1.bf16.msra.mxu0 0
    %762 = vmatprep.subr.bf16.mxu0 0
    %763 = vmatpush1.bf16.msra.mxu0 0
    %764 = vmatprep.subr.bf16.mxu0 0
    %765 = vmatpush1.bf16.msra.mxu0 0
    %766 = vmatprep.mubr.bf16.mxu0 0
    %767 = vmatmul.mubr.bf16.gmra.mrb[0].mxu0 %v732
    %v768 = vpop.f32.mrb[0].mxu0
    %v769 = vadd.f32 0.0, %v768
    %v770 = vpop.f32.mrb[0].mxu0
    %v771 = vpop.f32.mrb[0].mxu0
    %v772 = vpop.f32.mrb[0].mxu0
    %773 = vdwg.mxu0
    %774 = vmatprep.subr.bf16.mxu0 0
    %775 = vmatpush1.bf16.msra.mxu0 %v306
    %776 = vmatprep.subr.bf16.mxu0 0
    %777 = vmatpush1.bf16.msra.mxu0 %v307
    %778 = vmatprep.subr.bf16.mxu0 0
    %779 = vmatpush1.bf16.msra.mxu0 0
    %780 = vmatprep.subr.bf16.mxu0 0
    %781 = vmatpush1.bf16.msra.mxu0 0
    %782 = vmatprep.subr.bf16.mxu0 0
    %783 = vmatpush1.bf16.msra.mxu0 0
    %784 = vmatprep.subr.bf16.mxu0 0
    %785 = vmatpush1.bf16.msra.mxu0 0
    %786 = vmatprep.subr.bf16.mxu0 0
    %787 = vmatpush1.bf16.msra.mxu0 0
    %788 = vmatprep.subr.bf16.mxu0 0
    %789 = vmatpush1.bf16.msra.mxu0 0
    %790 = vmatprep.subr.bf16.mxu0 0
    %791 = vmatpush1.bf16.msra.mxu0 0
    %792 = vmatprep.subr.bf16.mxu0 0
    %793 = vmatpush1.bf16.msra.mxu0 0
    %794 = vmatprep.subr.bf16.mxu0 0
    %795 = vmatpush1.bf16.msra.mxu0 0
    %796 = vmatprep.subr.bf16.mxu0 0
    %797 = vmatpush1.bf16.msra.mxu0 0
    %798 = vmatprep.subr.bf16.mxu0 0
    %799 = vmatpush1.bf16.msra.mxu0 0
    %800 = vmatprep.subr.bf16.mxu0 0
    %801 = vmatpush1.bf16.msra.mxu0 0
    %802 = vmatprep.subr.bf16.mxu0 0
    %803 = vmatpush1.bf16.msra.mxu0 0
    %804 = vmatprep.subr.bf16.mxu0 0
    %805 = vmatpush1.bf16.msra.mxu0 0
    %806 = vmatprep.mubr.bf16.mxu0 0
    %807 = vmatmul.mubr.bf16.gmra.mrb[0].mxu0 %v642
    %v808 = vpop.f32.mrb[0].mxu0
    %v809 = vadd.f32 %v769, %v808
    %v810 = vpop.f32.mrb[0].mxu0
    %v811 = vpop.f32.mrb[0].mxu0
    %v812 = vpop.f32.mrb[0].mxu0
    %813 = vdwg.mxu0
    %v814 = vadd.f32 %v809, %v354
    %v815 = vxor.u32 %v727, 2147483648
    %v816 = vmul.f32 %v815, 1.442695
    %v817 = vpow.pop %v816
    %v818 = vadd.f32 %v817, 1.0
    %v819 = vrcp.pop %v818
    %v820 = vmul.f32 1.0, %v819
    %v821 = vtanh.pop %v727
    %v822 = vmul.f32 %v820, %v603
    %824 = vrot.lane.b32.xlu0 %v821, 32
    %v825 = vpop.permute.xlu0 %824
    %v827 = vmul.f32 %v820, %v825
    %829 = vrot.lane.b32.xlu0 %v827, 32
    %v830 = vpop.permute.xlu0 %829
    %v832 = vadd.f32 %v822, %v830
    %v833 = vtanh.pop %v832
    %835 = vrot.lane.b32.xlu0 %v833, 32
    %v836 = vpop.permute.xlu0 %835
    %v838 = vmul.f32 %v820, %v836
    %v839 = vpack.c.bf16 %v838, %v838
    %v840 = vxor.u32 %v814, 2147483648
    %v841 = vmul.f32 %v840, 1.442695
    %v842 = vpow.pop %v841
    %v843 = vadd.f32 %v842, 1.0
    %v844 = vrcp.pop %v843
    %v845 = vmul.f32 1.0, %v844
    %v846 = vtanh.pop %v814
    %v847 = vmul.f32 %v845, %v628
    %849 = vrot.lane.b32.xlu0 %v846, 32
    %v850 = vpop.permute.xlu0 %849
    %v852 = vmul.f32 %v845, %v850
    %854 = vrot.lane.b32.xlu0 %v852, 32
    %v855 = vpop.permute.xlu0 %854
    %v857 = vadd.f32 %v847, %v855
    %v858 = vtanh.pop %v857
    %860 = vrot.lane.b32.xlu0 %v858, 32
    %v861 = vpop.permute.xlu0 %860
    %v863 = vmul.f32 %v845, %v861
    %v864 = vpack.c.bf16 %v863, %v863
    %s865 = scalar_lea.vmem %s0, 4
    %v866 = vld [vmem:[%s865] sm:$0x1]
    %868 = vrot.lane.b32.xlu0 %v839, 64
    %v869 = vpop.permute.xlu0 %868
    %v871 = vsel %vm155, %v869, 0
    %873 = vmatprep.subr.bf16.mxu0 0
    %874 = vmatpush1.bf16.msra.mxu0 %v151
    %875 = vmatprep.subr.bf16.mxu0 0
    %876 = vmatpush1.bf16.msra.mxu0 %v152
    %877 = vmatprep.subr.bf16.mxu0 0
    %878 = vmatpush1.bf16.msra.mxu0 0
    %879 = vmatprep.subr.bf16.mxu0 0
    %880 = vmatpush1.bf16.msra.mxu0 0
    %881 = vmatprep.subr.bf16.mxu0 0
    %882 = vmatpush1.bf16.msra.mxu0 0
    %883 = vmatprep.subr.bf16.mxu0 0
    %884 = vmatpush1.bf16.msra.mxu0 0
    %885 = vmatprep.subr.bf16.mxu0 0
    %886 = vmatpush1.bf16.msra.mxu0 0
    %887 = vmatprep.subr.bf16.mxu0 0
    %888 = vmatpush1.bf16.msra.mxu0 0
    %889 = vmatprep.subr.bf16.mxu0 0
    %890 = vmatpush1.bf16.msra.mxu0 0
    %891 = vmatprep.subr.bf16.mxu0 0
    %892 = vmatpush1.bf16.msra.mxu0 0
    %893 = vmatprep.subr.bf16.mxu0 0
    %894 = vmatpush1.bf16.msra.mxu0 0
    %895 = vmatprep.subr.bf16.mxu0 0
    %896 = vmatpush1.bf16.msra.mxu0 0
    %897 = vmatprep.subr.bf16.mxu0 0
    %898 = vmatpush1.bf16.msra.mxu0 0
    %899 = vmatprep.subr.bf16.mxu0 0
    %900 = vmatpush1.bf16.msra.mxu0 0
    %901 = vmatprep.subr.bf16.mxu0 0
    %902 = vmatpush1.bf16.msra.mxu0 0
    %903 = vmatprep.subr.bf16.mxu0 0
    %904 = vmatpush1.bf16.msra.mxu0 0
    %905 = vmatprep.mubr.bf16.mxu0 0
    %906 = vmatmul.mubr.bf16.gmra.mrb[0].mxu0 %v871
    %v907 = vpop.f32.mrb[0].mxu0
    %v908 = vadd.f32 0.0, %v907
    %v909 = vpop.f32.mrb[0].mxu0
    %v910 = vpop.f32.mrb[0].mxu0
    %v911 = vpop.f32.mrb[0].mxu0
    %912 = vdwg.mxu0
    %v914 = vsel %vm69, %v866, 0
    %916 = vmatprep.subr.bf16.mxu0 0
    %917 = vmatpush1.bf16.msra.mxu0 %v67
    %918 = vmatprep.subr.bf16.mxu0 0
    %919 = vmatpush1.bf16.msra.mxu0 0
    %920 = vmatprep.subr.bf16.mxu0 0
    %921 = vmatpush1.bf16.msra.mxu0 0
    %922 = vmatprep.subr.bf16.mxu0 0
    %923 = vmatpush1.bf16.msra.mxu0 0
    %924 = vmatprep.subr.bf16.mxu0 0
    %925 = vmatpush1.bf16.msra.mxu0 0
    %926 = vmatprep.subr.bf16.mxu0 0
    %927 = vmatpush1.bf16.msra.mxu0 0
    %928 = vmatprep.subr.bf16.mxu0 0
    %929 = vmatpush1.bf16.msra.mxu0 0
    %930 = vmatprep.subr.bf16.mxu0 0
    %931 = vmatpush1.bf16.msra.mxu0 0
    %932 = vmatprep.subr.bf16.mxu0 0
    %933 = vmatpush1.bf16.msra.mxu0 0
    %934 = vmatprep.subr.bf16.mxu0 0
    %935 = vmatpush1.bf16.msra.mxu0 0
    %936 = vmatprep.subr.bf16.mxu0 0
    %937 = vmatpush1.bf16.msra.mxu0 0
    %938 = vmatprep.subr.bf16.mxu0 0
    %939 = vmatpush1.bf16.msra.mxu0 0
    %940 = vmatprep.subr.bf16.mxu0 0
    %941 = vmatpush1.bf16.msra.mxu0 0
    %942 = vmatprep.subr.bf16.mxu0 0
    %943 = vmatpush1.bf16.msra.mxu0 0
    %944 = vmatprep.subr.bf16.mxu0 0
    %945 = vmatpush1.bf16.msra.mxu0 0
    %946 = vmatprep.subr.bf16.mxu0 0
    %947 = vmatpush1.bf16.msra.mxu0 0
    %948 = vmatprep.mubr.bf16.mxu0 0
    %949 = vmatmul.mubr.bf16.gmra.mrb[0].mxu0 %v914
    %v950 = vpop.f32.mrb[0].mxu0
    %v951 = vadd.f32 %v908, %v950
    %v952 = vpop.f32.mrb[0].mxu0
    %v953 = vpop.f32.mrb[0].mxu0
    %v954 = vpop.f32.mrb[0].mxu0
    %955 = vdwg.mxu0
    %v956 = vadd.f32 %v951, %v61
    %958 = vrot.lane.b32.xlu0 %v864, 64
    %v959 = vpop.permute.xlu0 %958
    %v961 = vsel %vm155, %v959, 0
    %963 = vmatprep.subr.bf16.mxu0 0
    %964 = vmatpush1.bf16.msra.mxu0 %v251
    %965 = vmatprep.subr.bf16.mxu0 0
    %966 = vmatpush1.bf16.msra.mxu0 %v252
    %967 = vmatprep.subr.bf16.mxu0 0
    %968 = vmatpush1.bf16.msra.mxu0 0
    %969 = vmatprep.subr.bf16.mxu0 0
    %970 = vmatpush1.bf16.msra.mxu0 0
    %971 = vmatprep.subr.bf16.mxu0 0
    %972 = vmatpush1.bf16.msra.mxu0 0
    %973 = vmatprep.subr.bf16.mxu0 0
    %974 = vmatpush1.bf16.msra.mxu0 0
    %975 = vmatprep.subr.bf16.mxu0 0
    %976 = vmatpush1.bf16.msra.mxu0 0
    %977 = vmatprep.subr.bf16.mxu0 0
    %978 = vmatpush1.bf16.msra.mxu0 0
    %979 = vmatprep.subr.bf16.mxu0 0
    %980 = vmatpush1.bf16.msra.mxu0 0
    %981 = vmatprep.subr.bf16.mxu0 0
    %982 = vmatpush1.bf16.msra.mxu0 0
    %983 = vmatprep.subr.bf16.mxu0 0
    %984 = vmatpush1.bf16.msra.mxu0 0
    %985 = vmatprep.subr.bf16.mxu0 0
    %986 = vmatpush1.bf16.msra.mxu0 0
    %987 = vmatprep.subr.bf16.mxu0 0
    %988 = vmatpush1.bf16.msra.mxu0 0
    %989 = vmatprep.subr.bf16.mxu0 0
    %990 = vmatpush1.bf16.msra.mxu0 0
    %991 = vmatprep.subr.bf16.mxu0 0
    %992 = vmatpush1.bf16.msra.mxu0 0
    %993 = vmatprep.subr.bf16.mxu0 0
    %994 = vmatpush1.bf16.msra.mxu0 0
    %995 = vmatprep.mubr.bf16.mxu0 0
    %996 = vmatmul.mubr.bf16.gmra.mrb[0].mxu0 %v961
    %v997 = vpop.f32.mrb[0].mxu0
    %v998 = vadd.f32 0.0, %v997
    %v999 = vpop.f32.mrb[0].mxu0
    %v1000 = vpop.f32.mrb[0].mxu0
    %v1001 = vpop.f32.mrb[0].mxu0
    %1002 = vdwg.mxu0
    %1003 = vmatprep.subr.bf16.mxu0 0
    %1004 = vmatpush1.bf16.msra.mxu0 %v306
    %1005 = vmatprep.subr.bf16.mxu0 0
    %1006 = vmatpush1.bf16.msra.mxu0 %v307
    %1007 = vmatprep.subr.bf16.mxu0 0
    %1008 = vmatpush1.bf16.msra.mxu0 0
    %1009 = vmatprep.subr.bf16.mxu0 0
    %1010 = vmatpush1.bf16.msra.mxu0 0
    %1011 = vmatprep.subr.bf16.mxu0 0
    %1012 = vmatpush1.bf16.msra.mxu0 0
    %1013 = vmatprep.subr.bf16.mxu0 0
    %1014 = vmatpush1.bf16.msra.mxu0 0
    %1015 = vmatprep.subr.bf16.mxu0 0
    %1016 = vmatpush1.bf16.msra.mxu0 0
    %1017 = vmatprep.subr.bf16.mxu0 0
    %1018 = vmatpush1.bf16.msra.mxu0 0
    %1019 = vmatprep.subr.bf16.mxu0 0
    %1020 = vmatpush1.bf16.msra.mxu0 0
    %1021 = vmatprep.subr.bf16.mxu0 0
    %1022 = vmatpush1.bf16.msra.mxu0 0
    %1023 = vmatprep.subr.bf16.mxu0 0
    %1024 = vmatpush1.bf16.msra.mxu0 0
    %1025 = vmatprep.subr.bf16.mxu0 0
    %1026 = vmatpush1.bf16.msra.mxu0 0
    %1027 = vmatprep.subr.bf16.mxu0 0
    %1028 = vmatpush1.bf16.msra.mxu0 0
    %1029 = vmatprep.subr.bf16.mxu0 0
    %1030 = vmatpush1.bf16.msra.mxu0 0
    %1031 = vmatprep.subr.bf16.mxu0 0
    %1032 = vmatpush1.bf16.msra.mxu0 0
    %1033 = vmatprep.subr.bf16.mxu0 0
    %1034 = vmatpush1.bf16.msra.mxu0 0
    %1035 = vmatprep.mubr.bf16.mxu0 0
    %1036 = vmatmul.mubr.bf16.gmra.mrb[0].mxu0 %v871
    %v1037 = vpop.f32.mrb[0].mxu0
    %v1038 = vadd.f32 %v998, %v1037
    %v1039 = vpop.f32.mrb[0].mxu0
    %v1040 = vpop.f32.mrb[0].mxu0
    %v1041 = vpop.f32.mrb[0].mxu0
    %1042 = vdwg.mxu0
    %v1043 = vadd.f32 %v1038, %v354
    %v1044 = vxor.u32 %v956, 2147483648
    %v1045 = vmul.f32 %v1044, 1.442695
    %v1046 = vpow.pop %v1045
    %v1047 = vadd.f32 %v1046, 1.0
    %v1048 = vrcp.pop %v1047
    %v1049 = vmul.f32 1.0, %v1048
    %v1050 = vtanh.pop %v956
    %v1051 = vmul.f32 %v1049, %v832
    %1053 = vrot.lane.b32.xlu0 %v1050, 32
    %v1054 = vpop.permute.xlu0 %1053
    %v1056 = vmul.f32 %v1049, %v1054
    %1058 = vrot.lane.b32.xlu0 %v1056, 32
    %v1059 = vpop.permute.xlu0 %1058
    %v1061 = vadd.f32 %v1051, %v1059
    %v1062 = vtanh.pop %v1061
    %1064 = vrot.lane.b32.xlu0 %v1062, 32
    %v1065 = vpop.permute.xlu0 %1064
    %v1067 = vmul.f32 %v1049, %v1065
    %v1068 = vpack.c.bf16 %v1067, %v1067
    %v1069 = vxor.u32 %v1043, 2147483648
    %v1070 = vmul.f32 %v1069, 1.442695
    %v1071 = vpow.pop %v1070
    %v1072 = vadd.f32 %v1071, 1.0
    %v1073 = vrcp.pop %v1072
    %v1074 = vmul.f32 1.0, %v1073
    %v1075 = vtanh.pop %v1043
    %v1076 = vmul.f32 %v1074, %v857
    %1078 = vrot.lane.b32.xlu0 %v1075, 32
    %v1079 = vpop.permute.xlu0 %1078
    %v1081 = vmul.f32 %v1074, %v1079
    %1083 = vrot.lane.b32.xlu0 %v1081, 32
    %v1084 = vpop.permute.xlu0 %1083
    %v1086 = vadd.f32 %v1076, %v1084
    %v1087 = vtanh.pop %v1086
    %1089 = vrot.lane.b32.xlu0 %v1087, 32
    %v1090 = vpop.permute.xlu0 %1089
    %v1092 = vmul.f32 %v1074, %v1090
    %v1093 = vpack.c.bf16 %v1092, %v1092
    %s1094 = scalar_lea.vmem %s0, 5
    %v1095 = vld [vmem:[%s1094] sm:$0x1]
    %1097 = vrot.lane.b32.xlu0 %v1068, 64
    %v1098 = vpop.permute.xlu0 %1097
    %v1100 = vsel %vm155, %v1098, 0
    %1102 = vmatprep.subr.bf16.mxu0 0
    %1103 = vmatpush1.bf16.msra.mxu0 %v151
    %1104 = vmatprep.subr.bf16.mxu0 0
    %1105 = vmatpush1.bf16.msra.mxu0 %v152
    %1106 = vmatprep.subr.bf16.mxu0 0
    %1107 = vmatpush1.bf16.msra.mxu0 0
    %1108 = vmatprep.subr.bf16.mxu0 0
    %1109 = vmatpush1.bf16.msra.mxu0 0
    %1110 = vmatprep.subr.bf16.mxu0 0
    %1111 = vmatpush1.bf16.msra.mxu0 0
    %1112 = vmatprep.subr.bf16.mxu0 0
    %1113 = vmatpush1.bf16.msra.mxu0 0
    %1114 = vmatprep.subr.bf16.mxu0 0
    %1115 = vmatpush1.bf16.msra.mxu0 0
    %1116 = vmatprep.subr.bf16.mxu0 0
    %1117 = vmatpush1.bf16.msra.mxu0 0
    %1118 = vmatprep.subr.bf16.mxu0 0
    %1119 = vmatpush1.bf16.msra.mxu0 0
    %1120 = vmatprep.subr.bf16.mxu0 0
    %1121 = vmatpush1.bf16.msra.mxu0 0
    %1122 = vmatprep.subr.bf16.mxu0 0
    %1123 = vmatpush1.bf16.msra.mxu0 0
    %1124 = vmatprep.subr.bf16.mxu0 0
    %1125 = vmatpush1.bf16.msra.mxu0 0
    %1126 = vmatprep.subr.bf16.mxu0 0
    %1127 = vmatpush1.bf16.msra.mxu0 0
    %1128 = vmatprep.subr.bf16.mxu0 0
    %1129 = vmatpush1.bf16.msra.mxu0 0
    %1130 = vmatprep.subr.bf16.mxu0 0
    %1131 = vmatpush1.bf16.msra.mxu0 0
    %1132 = vmatprep.subr.bf16.mxu0 0
    %1133 = vmatpush1.bf16.msra.mxu0 0
    %1134 = vmatprep.mubr.bf16.mxu0 0
    %1135 = vmatmul.mubr.bf16.gmra.mrb[0].mxu0 %v1100
    %v1136 = vpop.f32.mrb[0].mxu0
    %v1137 = vadd.f32 0.0, %v1136
    %v1138 = vpop.f32.mrb[0].mxu0
    %v1139 = vpop.f32.mrb[0].mxu0
    %v1140 = vpop.f32.mrb[0].mxu0
    %1141 = vdwg.mxu0
    %v1143 = vsel %vm69, %v1095, 0
    %1145 = vmatprep.subr.bf16.mxu0 0
    %1146 = vmatpush1.bf16.msra.mxu0 %v67
    %1147 = vmatprep.subr.bf16.mxu0 0
    %1148 = vmatpush1.bf16.msra.mxu0 0
    %1149 = vmatprep.subr.bf16.mxu0 0
    %1150 = vmatpush1.bf16.msra.mxu0 0
    %1151 = vmatprep.subr.bf16.mxu0 0
    %1152 = vmatpush1.bf16.msra.mxu0 0
    %1153 = vmatprep.subr.bf16.mxu0 0
    %1154 = vmatpush1.bf16.msra.mxu0 0
    %1155 = vmatprep.subr.bf16.mxu0 0
    %1156 = vmatpush1.bf16.msra.mxu0 0
    %1157 = vmatprep.subr.bf16.mxu0 0
    %1158 = vmatpush1.bf16.msra.mxu0 0
    %1159 = vmatprep.subr.bf16.mxu0 0
    %1160 = vmatpush1.bf16.msra.mxu0 0
    %1161 = vmatprep.subr.bf16.mxu0 0
    %1162 = vmatpush1.bf16.msra.mxu0 0
    %1163 = vmatprep.subr.bf16.mxu0 0
    %1164 = vmatpush1.bf16.msra.mxu0 0
    %1165 = vmatprep.subr.bf16.mxu0 0
    %1166 = vmatpush1.bf16.msra.mxu0 0
    %1167 = vmatprep.subr.bf16.mxu0 0
    %1168 = vmatpush1.bf16.msra.mxu0 0
    %1169 = vmatprep.subr.bf16.mxu0 0
    %1170 = vmatpush1.bf16.msra.mxu0 0
    %1171 = vmatprep.subr.bf16.mxu0 0
    %1172 = vmatpush1.bf16.msra.mxu0 0
    %1173 = vmatprep.subr.bf16.mxu0 0
    %1174 = vmatpush1.bf16.msra.mxu0 0
    %1175 = vmatprep.subr.bf16.mxu0 0
    %1176 = vmatpush1.bf16.msra.mxu0 0
    %1177 = vmatprep.mubr.bf16.mxu0 0
    %1178 = vmatmul.mubr.bf16.gmra.mrb[0].mxu0 %v1143
    %v1179 = vpop.f32.mrb[0].mxu0
    %v1180 = vadd.f32 %v1137, %v1179
    %v1181 = vpop.f32.mrb[0].mxu0
    %v1182 = vpop.f32.mrb[0].mxu0
    %v1183 = vpop.f32.mrb[0].mxu0
    %1184 = vdwg.mxu0
    %v1185 = vadd.f32 %v1180, %v61
    %1187 = vrot.lane.b32.xlu0 %v1093, 64
    %v1188 = vpop.permute.xlu0 %1187
    %v1190 = vsel %vm155, %v1188, 0
    %1192 = vmatprep.subr.bf16.mxu0 0
    %1193 = vmatpush1.bf16.msra.mxu0 %v251
    %1194 = vmatprep.subr.bf16.mxu0 0
    %1195 = vmatpush1.bf16.msra.mxu0 %v252
    %1196 = vmatprep.subr.bf16.mxu0 0
    %1197 = vmatpush1.bf16.msra.mxu0 0
    %1198 = vmatprep.subr.bf16.mxu0 0
    %1199 = vmatpush1.bf16.msra.mxu0 0
    %1200 = vmatprep.subr.bf16.mxu0 0
    %1201 = vmatpush1.bf16.msra.mxu0 0
    %1202 = vmatprep.subr.bf16.mxu0 0
    %1203 = vmatpush1.bf16.msra.mxu0 0
    %1204 = vmatprep.subr.bf16.mxu0 0
    %1205 = vmatpush1.bf16.msra.mxu0 0
    %1206 = vmatprep.subr.bf16.mxu0 0
    %1207 = vmatpush1.bf16.msra.mxu0 0
    %1208 = vmatprep.subr.bf16.mxu0 0
    %1209 = vmatpush1.bf16.msra.mxu0 0
    %1210 = vmatprep.subr.bf16.mxu0 0
    %1211 = vmatpush1.bf16.msra.mxu0 0
    %1212 = vmatprep.subr.bf16.mxu0 0
    %1213 = vmatpush1.bf16.msra.mxu0 0
    %1214 = vmatprep.subr.bf16.mxu0 0
    %1215 = vmatpush1.bf16.msra.mxu0 0
    %1216 = vmatprep.subr.bf16.mxu0 0
    %1217 = vmatpush1.bf16.msra.mxu0 0
    %1218 = vmatprep.subr.bf16.mxu0 0
    %1219 = vmatpush1.bf16.msra.mxu0 0
    %1220 = vmatprep.subr.bf16.mxu0 0
    %1221 = vmatpush1.bf16.msra.mxu0 0
    %1222 = vmatprep.subr.bf16.mxu0 0
    %1223 = vmatpush1.bf16.msra.mxu0 0
    %1224 = vmatprep.mubr.bf16.mxu0 0
    %1225 = vmatmul.mubr.bf16.gmra.mrb[0].mxu0 %v1190
    %v1226 = vpop.f32.mrb[0].mxu0
    %v1227 = vadd.f32 0.0, %v1226
    %v1228 = vpop.f32.mrb[0].mxu0
    %v1229 = vpop.f32.mrb[0].mxu0
    %v1230 = vpop.f32.mrb[0].mxu0
    %1231 = vdwg.mxu0
    %1232 = vmatprep.subr.bf16.mxu0 0
    %1233 = vmatpush1.bf16.msra.mxu0 %v306
    %1234 = vmatprep.subr.bf16.mxu0 0
    %1235 = vmatpush1.bf16.msra.mxu0 %v307
    %1236 = vmatprep.subr.bf16.mxu0 0
    %1237 = vmatpush1.bf16.msra.mxu0 0
    %1238 = vmatprep.subr.bf16.mxu0 0
    %1239 = vmatpush1.bf16.msra.mxu0 0
    %1240 = vmatprep.subr.bf16.mxu0 0
    %1241 = vmatpush1.bf16.msra.mxu0 0
    %1242 = vmatprep.subr.bf16.mxu0 0
    %1243 = vmatpush1.bf16.msra.mxu0 0
    %1244 = vmatprep.subr.bf16.mxu0 0
    %1245 = vmatpush1.bf16.msra.mxu0 0
    %1246 = vmatprep.subr.bf16.mxu0 0
    %1247 = vmatpush1.bf16.msra.mxu0 0
    %1248 = vmatprep.subr.bf16.mxu0 0
    %1249 = vmatpush1.bf16.msra.mxu0 0
    %1250 = vmatprep.subr.bf16.mxu0 0
    %1251 = vmatpush1.bf16.msra.mxu0 0
    %1252 = vmatprep.subr.bf16.mxu0 0
    %1253 = vmatpush1.bf16.msra.mxu0 0
    %1254 = vmatprep.subr.bf16.mxu0 0
    %1255 = vmatpush1.bf16.msra.mxu0 0
    %1256 = vmatprep.subr.bf16.mxu0 0
    %1257 = vmatpush1.bf16.msra.mxu0 0
    %1258 = vmatprep.subr.bf16.mxu0 0
    %1259 = vmatpush1.bf16.msra.mxu0 0
    %1260 = vmatprep.subr.bf16.mxu0 0
    %1261 = vmatpush1.bf16.msra.mxu0 0
    %1262 = vmatprep.subr.bf16.mxu0 0
    %1263 = vmatpush1.bf16.msra.mxu0 0
    %1264 = vmatprep.mubr.bf16.mxu0 0
    %1265 = vmatmul.mubr.bf16.gmra.mrb[0].mxu0 %v1100
    %v1266 = vpop.f32.mrb[0].mxu0
    %v1267 = vadd.f32 %v1227, %v1266
    %v1268 = vpop.f32.mrb[0].mxu0
    %v1269 = vpop.f32.mrb[0].mxu0
    %v1270 = vpop.f32.mrb[0].mxu0
    %1271 = vdwg.mxu0
    %v1272 = vadd.f32 %v1267, %v354
    %v1273 = vxor.u32 %v1185, 2147483648
    %v1274 = vmul.f32 %v1273, 1.442695
    %v1275 = vpow.pop %v1274
    %v1276 = vadd.f32 %v1275, 1.0
    %v1277 = vrcp.pop %v1276
    %v1278 = vmul.f32 1.0, %v1277
    %v1279 = vtanh.pop %v1185
    %v1280 = vmul.f32 %v1278, %v1061
    %1282 = vrot.lane.b32.xlu0 %v1279, 32
    %v1283 = vpop.permute.xlu0 %1282
    %v1285 = vmul.f32 %v1278, %v1283
    %1287 = vrot.lane.b32.xlu0 %v1285, 32
    %v1288 = vpop.permute.xlu0 %1287
    %v1290 = vadd.f32 %v1280, %v1288
    %v1291 = vtanh.pop %v1290
    %1293 = vrot.lane.b32.xlu0 %v1291, 32
    %v1294 = vpop.permute.xlu0 %1293
    %v1296 = vmul.f32 %v1278, %v1294
    %v1297 = vpack.c.bf16 %v1296, %v1296
    %v1298 = vxor.u32 %v1272, 2147483648
    %v1299 = vmul.f32 %v1298, 1.442695
    %v1300 = vpow.pop %v1299
    %v1301 = vadd.f32 %v1300, 1.0
    %v1302 = vrcp.pop %v1301
    %v1303 = vmul.f32 1.0, %v1302
    %v1304 = vtanh.pop %v1272
    %v1305 = vmul.f32 %v1303, %v1086
    %1307 = vrot.lane.b32.xlu0 %v1304, 32
    %v1308 = vpop.permute.xlu0 %1307
    %v1310 = vmul.f32 %v1303, %v1308
    %1312 = vrot.lane.b32.xlu0 %v1310, 32
    %v1313 = vpop.permute.xlu0 %1312
    %v1315 = vadd.f32 %v1305, %v1313
    %v1316 = vtanh.pop %v1315
    %1318 = vrot.lane.b32.xlu0 %v1316, 32
    %v1319 = vpop.permute.xlu0 %1318
    %v1321 = vmul.f32 %v1303, %v1319
    %v1322 = vpack.c.bf16 %v1321, %v1321
    %s1323 = scalar_lea.vmem %s0, 6
    %v1324 = vld [vmem:[%s1323] sm:$0x1]
    %1326 = vrot.lane.b32.xlu0 %v1297, 64
    %v1327 = vpop.permute.xlu0 %1326
    %v1329 = vsel %vm155, %v1327, 0
    %1331 = vmatprep.subr.bf16.mxu0 0
    %1332 = vmatpush1.bf16.msra.mxu0 %v151
    %1333 = vmatprep.subr.bf16.mxu0 0
    %1334 = vmatpush1.bf16.msra.mxu0 %v152
    %1335 = vmatprep.subr.bf16.mxu0 0
    %1336 = vmatpush1.bf16.msra.mxu0 0
    %1337 = vmatprep.subr.bf16.mxu0 0
    %1338 = vmatpush1.bf16.msra.mxu0 0
    %1339 = vmatprep.subr.bf16.mxu0 0
    %1340 = vmatpush1.bf16.msra.mxu0 0
    %1341 = vmatprep.subr.bf16.mxu0 0
    %1342 = vmatpush1.bf16.msra.mxu0 0
    %1343 = vmatprep.subr.bf16.mxu0 0
    %1344 = vmatpush1.bf16.msra.mxu0 0
    %1345 = vmatprep.subr.bf16.mxu0 0
    %1346 = vmatpush1.bf16.msra.mxu0 0
    %1347 = vmatprep.subr.bf16.mxu0 0
    %1348 = vmatpush1.bf16.msra.mxu0 0
    %1349 = vmatprep.subr.bf16.mxu0 0
    %1350 = vmatpush1.bf16.msra.mxu0 0
    %1351 = vmatprep.subr.bf16.mxu0 0
    %1352 = vmatpush1.bf16.msra.mxu0 0
    %1353 = vmatprep.subr.bf16.mxu0 0
    %1354 = vmatpush1.bf16.msra.mxu0 0
    %1355 = vmatprep.subr.bf16.mxu0 0
    %1356 = vmatpush1.bf16.msra.mxu0 0
    %1357 = vmatprep.subr.bf16.mxu0 0
    %1358 = vmatpush1.bf16.msra.mxu0 0
    %1359 = vmatprep.subr.bf16.mxu0 0
    %1360 = vmatpush1.bf16.msra.mxu0 0
    %1361 = vmatprep.subr.bf16.mxu0 0
    %1362 = vmatpush1.bf16.msra.mxu0 0
    %1363 = vmatprep.mubr.bf16.mxu0 0
    %1364 = vmatmul.mubr.bf16.gmra.mrb[0].mxu0 %v1329
    %v1365 = vpop.f32.mrb[0].mxu0
    %v1366 = vadd.f32 0.0, %v1365
    %v1367 = vpop.f32.mrb[0].mxu0
    %v1368 = vpop.f32.mrb[0].mxu0
    %v1369 = vpop.f32.mrb[0].mxu0
    %1370 = vdwg.mxu0
    %v1372 = vsel %vm69, %v1324, 0
    %1374 = vmatprep.subr.bf16.mxu0 0
    %1375 = vmatpush1.bf16.msra.mxu0 %v67
    %1376 = vmatprep.subr.bf16.mxu0 0
    %1377 = vmatpush1.bf16.msra.mxu0 0
    %1378 = vmatprep.subr.bf16.mxu0 0
    %1379 = vmatpush1.bf16.msra.mxu0 0
    %1380 = vmatprep.subr.bf16.mxu0 0
    %1381 = vmatpush1.bf16.msra.mxu0 0
    %1382 = vmatprep.subr.bf16.mxu0 0
    %1383 = vmatpush1.bf16.msra.mxu0 0
    %1384 = vmatprep.subr.bf16.mxu0 0
    %1385 = vmatpush1.bf16.msra.mxu0 0
    %1386 = vmatprep.subr.bf16.mxu0 0
    %1387 = vmatpush1.bf16.msra.mxu0 0
    %1388 = vmatprep.subr.bf16.mxu0 0
    %1389 = vmatpush1.bf16.msra.mxu0 0
    %1390 = vmatprep.subr.bf16.mxu0 0
    %1391 = vmatpush1.bf16.msra.mxu0 0
    %1392 = vmatprep.subr.bf16.mxu0 0
    %1393 = vmatpush1.bf16.msra.mxu0 0
    %1394 = vmatprep.subr.bf16.mxu0 0
    %1395 = vmatpush1.bf16.msra.mxu0 0
    %1396 = vmatprep.subr.bf16.mxu0 0
    %1397 = vmatpush1.bf16.msra.mxu0 0
    %1398 = vmatprep.subr.bf16.mxu0 0
    %1399 = vmatpush1.bf16.msra.mxu0 0
    %1400 = vmatprep.subr.bf16.mxu0 0
    %1401 = vmatpush1.bf16.msra.mxu0 0
    %1402 = vmatprep.subr.bf16.mxu0 0
    %1403 = vmatpush1.bf16.msra.mxu0 0
    %1404 = vmatprep.subr.bf16.mxu0 0
    %1405 = vmatpush1.bf16.msra.mxu0 0
    %1406 = vmatprep.mubr.bf16.mxu0 0
    %1407 = vmatmul.mubr.bf16.gmra.mrb[0].mxu0 %v1372
    %v1408 = vpop.f32.mrb[0].mxu0
    %v1409 = vadd.f32 %v1366, %v1408
    %v1410 = vpop.f32.mrb[0].mxu0
    %v1411 = vpop.f32.mrb[0].mxu0
    %v1412 = vpop.f32.mrb[0].mxu0
    %1413 = vdwg.mxu0
    %v1414 = vadd.f32 %v1409, %v61
    %1416 = vrot.lane.b32.xlu0 %v1322, 64
    %v1417 = vpop.permute.xlu0 %1416
    %v1419 = vsel %vm155, %v1417, 0
    %1421 = vmatprep.subr.bf16.mxu0 0
    %1422 = vmatpush1.bf16.msra.mxu0 %v251
    %1423 = vmatprep.subr.bf16.mxu0 0
    %1424 = vmatpush1.bf16.msra.mxu0 %v252
    %1425 = vmatprep.subr.bf16.mxu0 0
    %1426 = vmatpush1.bf16.msra.mxu0 0
    %1427 = vmatprep.subr.bf16.mxu0 0
    %1428 = vmatpush1.bf16.msra.mxu0 0
    %1429 = vmatprep.subr.bf16.mxu0 0
    %1430 = vmatpush1.bf16.msra.mxu0 0
    %1431 = vmatprep.subr.bf16.mxu0 0
    %1432 = vmatpush1.bf16.msra.mxu0 0
    %1433 = vmatprep.subr.bf16.mxu0 0
    %1434 = vmatpush1.bf16.msra.mxu0 0
    %1435 = vmatprep.subr.bf16.mxu0 0
    %1436 = vmatpush1.bf16.msra.mxu0 0
    %1437 = vmatprep.subr.bf16.mxu0 0
    %1438 = vmatpush1.bf16.msra.mxu0 0
    %1439 = vmatprep.subr.bf16.mxu0 0
    %1440 = vmatpush1.bf16.msra.mxu0 0
    %1441 = vmatprep.subr.bf16.mxu0 0
    %1442 = vmatpush1.bf16.msra.mxu0 0
    %1443 = vmatprep.subr.bf16.mxu0 0
    %1444 = vmatpush1.bf16.msra.mxu0 0
    %1445 = vmatprep.subr.bf16.mxu0 0
    %1446 = vmatpush1.bf16.msra.mxu0 0
    %1447 = vmatprep.subr.bf16.mxu0 0
    %1448 = vmatpush1.bf16.msra.mxu0 0
    %1449 = vmatprep.subr.bf16.mxu0 0
    %1450 = vmatpush1.bf16.msra.mxu0 0
    %1451 = vmatprep.subr.bf16.mxu0 0
    %1452 = vmatpush1.bf16.msra.mxu0 0
    %1453 = vmatprep.mubr.bf16.mxu0 0
    %1454 = vmatmul.mubr.bf16.gmra.mrb[0].mxu0 %v1419
    %v1455 = vpop.f32.mrb[0].mxu0
    %v1456 = vadd.f32 0.0, %v1455
    %v1457 = vpop.f32.mrb[0].mxu0
    %v1458 = vpop.f32.mrb[0].mxu0
    %v1459 = vpop.f32.mrb[0].mxu0
    %1460 = vdwg.mxu0
    %1461 = vmatprep.subr.bf16.mxu0 0
    %1462 = vmatpush1.bf16.msra.mxu0 %v306
    %1463 = vmatprep.subr.bf16.mxu0 0
    %1464 = vmatpush1.bf16.msra.mxu0 %v307
    %1465 = vmatprep.subr.bf16.mxu0 0
    %1466 = vmatpush1.bf16.msra.mxu0 0
    %1467 = vmatprep.subr.bf16.mxu0 0
    %1468 = vmatpush1.bf16.msra.mxu0 0
    %1469 = vmatprep.subr.bf16.mxu0 0
    %1470 = vmatpush1.bf16.msra.mxu0 0
    %1471 = vmatprep.subr.bf16.mxu0 0
    %1472 = vmatpush1.bf16.msra.mxu0 0
    %1473 = vmatprep.subr.bf16.mxu0 0
    %1474 = vmatpush1.bf16.msra.mxu0 0
    %1475 = vmatprep.subr.bf16.mxu0 0
    %1476 = vmatpush1.bf16.msra.mxu0 0
    %1477 = vmatprep.subr.bf16.mxu0 0
    %1478 = vmatpush1.bf16.msra.mxu0 0
    %1479 = vmatprep.subr.bf16.mxu0 0
    %1480 = vmatpush1.bf16.msra.mxu0 0
    %1481 = vmatprep.subr.bf16.mxu0 0
    %1482 = vmatpush1.bf16.msra.mxu0 0
    %1483 = vmatprep.subr.bf16.mxu0 0
    %1484 = vmatpush1.bf16.msra.mxu0 0
    %1485 = vmatprep.subr.bf16.mxu0 0
    %1486 = vmatpush1.bf16.msra.mxu0 0
    %1487 = vmatprep.subr.bf16.mxu0 0
    %1488 = vmatpush1.bf16.msra.mxu0 0
    %1489 = vmatprep.subr.bf16.mxu0 0
    %1490 = vmatpush1.bf16.msra.mxu0 0
    %1491 = vmatprep.subr.bf16.mxu0 0
    %1492 = vmatpush1.bf16.msra.mxu0 0
    %1493 = vmatprep.mubr.bf16.mxu0 0
    %1494 = vmatmul.mubr.bf16.gmra.mrb[0].mxu0 %v1329
    %v1495 = vpop.f32.mrb[0].mxu0
    %v1496 = vadd.f32 %v1456, %v1495
    %v1497 = vpop.f32.mrb[0].mxu0
    %v1498 = vpop.f32.mrb[0].mxu0
    %v1499 = vpop.f32.mrb[0].mxu0
    %1500 = vdwg.mxu0
    %v1501 = vadd.f32 %v1496, %v354
    %v1502 = vxor.u32 %v1414, 2147483648
    %v1503 = vmul.f32 %v1502, 1.442695
    %v1504 = vpow.pop %v1503
    %v1505 = vadd.f32 %v1504, 1.0
    %v1506 = vrcp.pop %v1505
    %v1507 = vmul.f32 1.0, %v1506
    %v1508 = vtanh.pop %v1414
    %v1509 = vmul.f32 %v1507, %v1290
    %1511 = vrot.lane.b32.xlu0 %v1508, 32
    %v1512 = vpop.permute.xlu0 %1511
    %v1514 = vmul.f32 %v1507, %v1512
    %1516 = vrot.lane.b32.xlu0 %v1514, 32
    %v1517 = vpop.permute.xlu0 %1516
    %v1519 = vadd.f32 %v1509, %v1517
    %v1520 = vtanh.pop %v1519
    %1522 = vrot.lane.b32.xlu0 %v1520, 32
    %v1523 = vpop.permute.xlu0 %1522
    %v1525 = vmul.f32 %v1507, %v1523
    %v1526 = vpack.c.bf16 %v1525, %v1525
    %v1527 = vxor.u32 %v1501, 2147483648
    %v1528 = vmul.f32 %v1527, 1.442695
    %v1529 = vpow.pop %v1528
    %v1530 = vadd.f32 %v1529, 1.0
    %v1531 = vrcp.pop %v1530
    %v1532 = vmul.f32 1.0, %v1531
    %v1533 = vtanh.pop %v1501
    %v1534 = vmul.f32 %v1532, %v1315
    %1536 = vrot.lane.b32.xlu0 %v1533, 32
    %v1537 = vpop.permute.xlu0 %1536
    %v1539 = vmul.f32 %v1532, %v1537
    %1541 = vrot.lane.b32.xlu0 %v1539, 32
    %v1542 = vpop.permute.xlu0 %1541
    %v1544 = vadd.f32 %v1534, %v1542
    %v1545 = vtanh.pop %v1544
    %1547 = vrot.lane.b32.xlu0 %v1545, 32
    %v1548 = vpop.permute.xlu0 %1547
    %v1550 = vmul.f32 %v1532, %v1548
    %v1551 = vpack.c.bf16 %v1550, %v1550
    %s1552 = scalar_lea.vmem %s0, 7
    %v1553 = vld [vmem:[%s1552] sm:$0x1]
    %1555 = vrot.lane.b32.xlu0 %v1526, 64
    %v1556 = vpop.permute.xlu0 %1555
    %v1558 = vsel %vm155, %v1556, 0
    %1560 = vmatprep.subr.bf16.mxu0 0
    %1561 = vmatpush1.bf16.msra.mxu0 %v151
    %1562 = vmatprep.subr.bf16.mxu0 0
    %1563 = vmatpush1.bf16.msra.mxu0 %v152
    %1564 = vmatprep.subr.bf16.mxu0 0
    %1565 = vmatpush1.bf16.msra.mxu0 0
    %1566 = vmatprep.subr.bf16.mxu0 0
    %1567 = vmatpush1.bf16.msra.mxu0 0
    %1568 = vmatprep.subr.bf16.mxu0 0
    %1569 = vmatpush1.bf16.msra.mxu0 0
    %1570 = vmatprep.subr.bf16.mxu0 0
    %1571 = vmatpush1.bf16.msra.mxu0 0
    %1572 = vmatprep.subr.bf16.mxu0 0
    %1573 = vmatpush1.bf16.msra.mxu0 0
    %1574 = vmatprep.subr.bf16.mxu0 0
    %1575 = vmatpush1.bf16.msra.mxu0 0
    %1576 = vmatprep.subr.bf16.mxu0 0
    %1577 = vmatpush1.bf16.msra.mxu0 0
    %1578 = vmatprep.subr.bf16.mxu0 0
    %1579 = vmatpush1.bf16.msra.mxu0 0
    %1580 = vmatprep.subr.bf16.mxu0 0
    %1581 = vmatpush1.bf16.msra.mxu0 0
    %1582 = vmatprep.subr.bf16.mxu0 0
    %1583 = vmatpush1.bf16.msra.mxu0 0
    %1584 = vmatprep.subr.bf16.mxu0 0
    %1585 = vmatpush1.bf16.msra.mxu0 0
    %1586 = vmatprep.subr.bf16.mxu0 0
    %1587 = vmatpush1.bf16.msra.mxu0 0
    %1588 = vmatprep.subr.bf16.mxu0 0
    %1589 = vmatpush1.bf16.msra.mxu0 0
    %1590 = vmatprep.subr.bf16.mxu0 0
    %1591 = vmatpush1.bf16.msra.mxu0 0
    %1592 = vmatprep.mubr.bf16.mxu0 0
    %1593 = vmatmul.mubr.bf16.gmra.mrb[0].mxu0 %v1558
    %v1594 = vpop.f32.mrb[0].mxu0
    %v1595 = vadd.f32 0.0, %v1594
    %v1596 = vpop.f32.mrb[0].mxu0
    %v1597 = vpop.f32.mrb[0].mxu0
    %v1598 = vpop.f32.mrb[0].mxu0
    %1599 = vdwg.mxu0
    %v1601 = vsel %vm69, %v1553, 0
    %1603 = vmatprep.subr.bf16.mxu0 0
    %1604 = vmatpush1.bf16.msra.mxu0 %v67
    %1605 = vmatprep.subr.bf16.mxu0 0
    %1606 = vmatpush1.bf16.msra.mxu0 0
    %1607 = vmatprep.subr.bf16.mxu0 0
    %1608 = vmatpush1.bf16.msra.mxu0 0
    %1609 = vmatprep.subr.bf16.mxu0 0
    %1610 = vmatpush1.bf16.msra.mxu0 0
    %1611 = vmatprep.subr.bf16.mxu0 0
    %1612 = vmatpush1.bf16.msra.mxu0 0
    %1613 = vmatprep.subr.bf16.mxu0 0
    %1614 = vmatpush1.bf16.msra.mxu0 0
    %1615 = vmatprep.subr.bf16.mxu0 0
    %1616 = vmatpush1.bf16.msra.mxu0 0
    %1617 = vmatprep.subr.bf16.mxu0 0
    %1618 = vmatpush1.bf16.msra.mxu0 0
    %1619 = vmatprep.subr.bf16.mxu0 0
    %1620 = vmatpush1.bf16.msra.mxu0 0
    %1621 = vmatprep.subr.bf16.mxu0 0
    %1622 = vmatpush1.bf16.msra.mxu0 0
    %1623 = vmatprep.subr.bf16.mxu0 0
    %1624 = vmatpush1.bf16.msra.mxu0 0
    %1625 = vmatprep.subr.bf16.mxu0 0
    %1626 = vmatpush1.bf16.msra.mxu0 0
    %1627 = vmatprep.subr.bf16.mxu0 0
    %1628 = vmatpush1.bf16.msra.mxu0 0
    %1629 = vmatprep.subr.bf16.mxu0 0
    %1630 = vmatpush1.bf16.msra.mxu0 0
    %1631 = vmatprep.subr.bf16.mxu0 0
    %1632 = vmatpush1.bf16.msra.mxu0 0
    %1633 = vmatprep.subr.bf16.mxu0 0
    %1634 = vmatpush1.bf16.msra.mxu0 0
    %1635 = vmatprep.mubr.bf16.mxu0 0
    %1636 = vmatmul.mubr.bf16.gmra.mrb[0].mxu0 %v1601
    %v1637 = vpop.f32.mrb[0].mxu0
    %v1638 = vadd.f32 %v1595, %v1637
    %v1639 = vpop.f32.mrb[0].mxu0
    %v1640 = vpop.f32.mrb[0].mxu0
    %v1641 = vpop.f32.mrb[0].mxu0
    %1642 = vdwg.mxu0
    %v1643 = vadd.f32 %v1638, %v61
    %1645 = vrot.lane.b32.xlu0 %v1551, 64
    %v1646 = vpop.permute.xlu0 %1645
    %v1648 = vsel %vm155, %v1646, 0
    %1650 = vmatprep.subr.bf16.mxu0 0
    %1651 = vmatpush1.bf16.msra.mxu0 %v251
    %1652 = vmatprep.subr.bf16.mxu0 0
    %1653 = vmatpush1.bf16.msra.mxu0 %v252
    %1654 = vmatprep.subr.bf16.mxu0 0
    %1655 = vmatpush1.bf16.msra.mxu0 0
    %1656 = vmatprep.subr.bf16.mxu0 0
    %1657 = vmatpush1.bf16.msra.mxu0 0
    %1658 = vmatprep.subr.bf16.mxu0 0
    %1659 = vmatpush1.bf16.msra.mxu0 0
    %1660 = vmatprep.subr.bf16.mxu0 0
    %1661 = vmatpush1.bf16.msra.mxu0 0
    %1662 = vmatprep.subr.bf16.mxu0 0
    %1663 = vmatpush1.bf16.msra.mxu0 0
    %1664 = vmatprep.subr.bf16.mxu0 0
    %1665 = vmatpush1.bf16.msra.mxu0 0
    %1666 = vmatprep.subr.bf16.mxu0 0
    %1667 = vmatpush1.bf16.msra.mxu0 0
    %1668 = vmatprep.subr.bf16.mxu0 0
    %1669 = vmatpush1.bf16.msra.mxu0 0
    %1670 = vmatprep.subr.bf16.mxu0 0
    %1671 = vmatpush1.bf16.msra.mxu0 0
    %1672 = vmatprep.subr.bf16.mxu0 0
    %1673 = vmatpush1.bf16.msra.mxu0 0
    %1674 = vmatprep.subr.bf16.mxu0 0
    %1675 = vmatpush1.bf16.msra.mxu0 0
    %1676 = vmatprep.subr.bf16.mxu0 0
    %1677 = vmatpush1.bf16.msra.mxu0 0
    %1678 = vmatprep.subr.bf16.mxu0 0
    %1679 = vmatpush1.bf16.msra.mxu0 0
    %1680 = vmatprep.subr.bf16.mxu0 0
    %1681 = vmatpush1.bf16.msra.mxu0 0
    %1682 = vmatprep.mubr.bf16.mxu0 0
    %1683 = vmatmul.mubr.bf16.gmra.mrb[0].mxu0 %v1648
    %v1684 = vpop.f32.mrb[0].mxu0
    %v1685 = vadd.f32 0.0, %v1684
    %v1686 = vpop.f32.mrb[0].mxu0
    %v1687 = vpop.f32.mrb[0].mxu0
    %v1688 = vpop.f32.mrb[0].mxu0
    %1689 = vdwg.mxu0
    %1690 = vmatprep.subr.bf16.mxu0 0
    %1691 = vmatpush1.bf16.msra.mxu0 %v306
    %1692 = vmatprep.subr.bf16.mxu0 0
    %1693 = vmatpush1.bf16.msra.mxu0 %v307
    %1694 = vmatprep.subr.bf16.mxu0 0
    %1695 = vmatpush1.bf16.msra.mxu0 0
    %1696 = vmatprep.subr.bf16.mxu0 0
    %1697 = vmatpush1.bf16.msra.mxu0 0
    %1698 = vmatprep.subr.bf16.mxu0 0
    %1699 = vmatpush1.bf16.msra.mxu0 0
    %1700 = vmatprep.subr.bf16.mxu0 0
    %1701 = vmatpush1.bf16.msra.mxu0 0
    %1702 = vmatprep.subr.bf16.mxu0 0
    %1703 = vmatpush1.bf16.msra.mxu0 0
    %1704 = vmatprep.subr.bf16.mxu0 0
    %1705 = vmatpush1.bf16.msra.mxu0 0
    %1706 = vmatprep.subr.bf16.mxu0 0
    %1707 = vmatpush1.bf16.msra.mxu0 0
    %1708 = vmatprep.subr.bf16.mxu0 0
    %1709 = vmatpush1.bf16.msra.mxu0 0
    %1710 = vmatprep.subr.bf16.mxu0 0
    %1711 = vmatpush1.bf16.msra.mxu0 0
    %1712 = vmatprep.subr.bf16.mxu0 0
    %1713 = vmatpush1.bf16.msra.mxu0 0
    %1714 = vmatprep.subr.bf16.mxu0 0
    %1715 = vmatpush1.bf16.msra.mxu0 0
    %1716 = vmatprep.subr.bf16.mxu0 0
    %1717 = vmatpush1.bf16.msra.mxu0 0
    %1718 = vmatprep.subr.bf16.mxu0 0
    %1719 = vmatpush1.bf16.msra.mxu0 0
    %1720 = vmatprep.subr.bf16.mxu0 0
    %1721 = vmatpush1.bf16.msra.mxu0 0
    %1722 = vmatprep.mubr.bf16.mxu0 0
    %1723 = vmatmul.mubr.bf16.gmra.mrb[0].mxu0 %v1558
    %v1724 = vpop.f32.mrb[0].mxu0
    %v1725 = vadd.f32 %v1685, %v1724
    %v1726 = vpop.f32.mrb[0].mxu0
    %v1727 = vpop.f32.mrb[0].mxu0
    %v1728 = vpop.f32.mrb[0].mxu0
    %1729 = vdwg.mxu0
    %v1730 = vadd.f32 %v1725, %v354
    %v1731 = vxor.u32 %v1643, 2147483648
    %v1732 = vmul.f32 %v1731, 1.442695
    %v1733 = vpow.pop %v1732
    %v1734 = vadd.f32 %v1733, 1.0
    %v1735 = vrcp.pop %v1734
    %v1736 = vmul.f32 1.0, %v1735
    %v1737 = vtanh.pop %v1643
    %v1738 = vmul.f32 %v1736, %v1519
    %1740 = vrot.lane.b32.xlu0 %v1737, 32
    %v1741 = vpop.permute.xlu0 %1740
    %v1743 = vmul.f32 %v1736, %v1741
    %1745 = vrot.lane.b32.xlu0 %v1743, 32
    %v1746 = vpop.permute.xlu0 %1745
    %v1748 = vadd.f32 %v1738, %v1746
    %v1749 = vtanh.pop %v1748
    %1751 = vrot.lane.b32.xlu0 %v1749, 32
    %v1752 = vpop.permute.xlu0 %1751
    %v1754 = vmul.f32 %v1736, %v1752
    %v1755 = vpack.c.bf16 %v1754, %v1754
    %v1756 = vxor.u32 %v1730, 2147483648
    %v1757 = vmul.f32 %v1756, 1.442695
    %v1758 = vpow.pop %v1757
    %v1759 = vadd.f32 %v1758, 1.0
    %v1760 = vrcp.pop %v1759
    %v1761 = vmul.f32 1.0, %v1760
    %v1762 = vtanh.pop %v1730
    %v1763 = vmul.f32 %v1761, %v1544
    %1765 = vrot.lane.b32.xlu0 %v1762, 32
    %v1766 = vpop.permute.xlu0 %1765
    %v1768 = vmul.f32 %v1761, %v1766
    %1770 = vrot.lane.b32.xlu0 %v1768, 32
    %v1771 = vpop.permute.xlu0 %1770
    %v1773 = vadd.f32 %v1763, %v1771
    %v1774 = vtanh.pop %v1773
    %1776 = vrot.lane.b32.xlu0 %v1774, 32
    %v1777 = vpop.permute.xlu0 %1776
    %v1779 = vmul.f32 %v1761, %v1777
    %v1780 = vpack.c.bf16 %v1779, %v1779
    %1782 = vrot.lane.b32.xlu0 %v1780, 64
    %v1783 = vpop.permute.xlu0 %1782
    %v1785 = vsel %vm155, %v1783, 0
    %1787 = vmatprep.subr.bf16.mxu0 0
    %1788 = vmatpush1.bf16.msra.mxu0 %v251
    %1789 = vmatprep.subr.bf16.mxu0 0
    %1790 = vmatpush1.bf16.msra.mxu0 %v252
    %1791 = vmatprep.subr.bf16.mxu0 0
    %1792 = vmatpush1.bf16.msra.mxu0 0
    %1793 = vmatprep.subr.bf16.mxu0 0
    %1794 = vmatpush1.bf16.msra.mxu0 0
    %1795 = vmatprep.subr.bf16.mxu0 0
    %1796 = vmatpush1.bf16.msra.mxu0 0
    %1797 = vmatprep.subr.bf16.mxu0 0
    %1798 = vmatpush1.bf16.msra.mxu0 0
    %1799 = vmatprep.subr.bf16.mxu0 0
    %1800 = vmatpush1.bf16.msra.mxu0 0
    %1801 = vmatprep.subr.bf16.mxu0 0
    %1802 = vmatpush1.bf16.msra.mxu0 0
    %1803 = vmatprep.subr.bf16.mxu0 0
    %1804 = vmatpush1.bf16.msra.mxu0 0
    %1805 = vmatprep.subr.bf16.mxu0 0
    %1806 = vmatpush1.bf16.msra.mxu0 0
    %1807 = vmatprep.subr.bf16.mxu0 0
    %1808 = vmatpush1.bf16.msra.mxu0 0
    %1809 = vmatprep.subr.bf16.mxu0 0
    %1810 = vmatpush1.bf16.msra.mxu0 0
    %1811 = vmatprep.subr.bf16.mxu0 0
    %1812 = vmatpush1.bf16.msra.mxu0 0
    %1813 = vmatprep.subr.bf16.mxu0 0
    %1814 = vmatpush1.bf16.msra.mxu0 0
    %1815 = vmatprep.subr.bf16.mxu0 0
    %1816 = vmatpush1.bf16.msra.mxu0 0
    %1817 = vmatprep.subr.bf16.mxu0 0
    %1818 = vmatpush1.bf16.msra.mxu0 0
    %1819 = vmatprep.mubr.bf16.mxu0 0
    %1820 = vmatmul.mubr.bf16.gmra.mrb[0].mxu0 %v1785
    %v1821 = vpop.f32.mrb[0].mxu0
    %v1822 = vadd.f32 0.0, %v1821
    %v1823 = vpop.f32.mrb[0].mxu0
    %v1824 = vpop.f32.mrb[0].mxu0
    %v1825 = vpop.f32.mrb[0].mxu0
    %1826 = vdwg.mxu0
    %1828 = vrot.lane.b32.xlu0 %v1755, 64
    %v1829 = vpop.permute.xlu0 %1828
    %v1831 = vsel %vm155, %v1829, 0
    %1833 = vmatprep.subr.bf16.mxu0 0
    %1834 = vmatpush1.bf16.msra.mxu0 %v306
    %1835 = vmatprep.subr.bf16.mxu0 0
    %1836 = vmatpush1.bf16.msra.mxu0 %v307
    %1837 = vmatprep.subr.bf16.mxu0 0
    %1838 = vmatpush1.bf16.msra.mxu0 0
    %1839 = vmatprep.subr.bf16.mxu0 0
    %1840 = vmatpush1.bf16.msra.mxu0 0
    %1841 = vmatprep.subr.bf16.mxu0 0
    %1842 = vmatpush1.bf16.msra.mxu0 0
    %1843 = vmatprep.subr.bf16.mxu0 0
    %1844 = vmatpush1.bf16.msra.mxu0 0
    %1845 = vmatprep.subr.bf16.mxu0 0
    %1846 = vmatpush1.bf16.msra.mxu0 0
    %1847 = vmatprep.subr.bf16.mxu0 0
    %1848 = vmatpush1.bf16.msra.mxu0 0
    %1849 = vmatprep.subr.bf16.mxu0 0
    %1850 = vmatpush1.bf16.msra.mxu0 0
    %1851 = vmatprep.subr.bf16.mxu0 0
    %1852 = vmatpush1.bf16.msra.mxu0 0
    %1853 = vmatprep.subr.bf16.mxu0 0
    %1854 = vmatpush1.bf16.msra.mxu0 0
    %1855 = vmatprep.subr.bf16.mxu0 0
    %1856 = vmatpush1.bf16.msra.mxu0 0
    %1857 = vmatprep.subr.bf16.mxu0 0
    %1858 = vmatpush1.bf16.msra.mxu0 0
    %1859 = vmatprep.subr.bf16.mxu0 0
    %1860 = vmatpush1.bf16.msra.mxu0 0
    %1861 = vmatprep.subr.bf16.mxu0 0
    %1862 = vmatpush1.bf16.msra.mxu0 0
    %1863 = vmatprep.subr.bf16.mxu0 0
    %1864 = vmatpush1.bf16.msra.mxu0 0
    %1865 = vmatprep.mubr.bf16.mxu0 0
    %1866 = vmatmul.mubr.bf16.gmra.mrb[0].mxu0 %v1831
    %v1867 = vpop.f32.mrb[0].mxu0
    %v1868 = vadd.f32 %v1822, %v1867
    %v1869 = vpop.f32.mrb[0].mxu0
    %v1870 = vpop.f32.mrb[0].mxu0
    %v1871 = vpop.f32.mrb[0].mxu0
    %1872 = vdwg.mxu0
    %v1873 = vadd.f32 %v1868, %v354
    %v1874 = vxor.u32 %v1873, 2147483648
    %v1875 = vmul.f32 %v1874, 1.442695
    %v1876 = vpow.pop %v1875
    %v1877 = vadd.f32 %v1876, 1.0
    %v1878 = vrcp.pop %v1877
    %v1879 = vmul.f32 1.0, %v1878
    %v1880 = vtanh.pop %v1873
    %v1881 = vmul.f32 %v1879, %v1773
    %1883 = vrot.lane.b32.xlu0 %v1880, 32
    %v1884 = vpop.permute.xlu0 %1883
    %v1886 = vmul.f32 %v1879, %v1884
    %1888 = vrot.lane.b32.xlu0 %v1886, 32
    %v1889 = vpop.permute.xlu0 %1888
    %v1891 = vadd.f32 %v1881, %v1889
    %v1892 = vtanh.pop %v1891
    %1894 = vrot.lane.b32.xlu0 %v1892, 32
    %v1895 = vpop.permute.xlu0 %1894
    %v1897 = vmul.f32 %v1879, %v1895
    %v1898 = vpack.c.bf16 %v1897, %v1897
    %v1899 = vld [vmem:[%s7] sm:$0xf]
    %v1900 = vld [vmem:[%s7 + $0x4] sm:$0xf]
    %v1901 = vld [vmem:[%s7 + $0x8] sm:$0xf]
    %v1902 = vld [vmem:[%s7 + $0xc] sm:$0xf]
    %v1903 = vld [vmem:[%s8] sm:$0x1]
    %v1905 = vlaneseq
    %v1906 = vshrl.u32 %v1905, 7
    %v1907 = vsub.s32 0, %v1906
    %v1908 = vrot.slane %v1903, %v1907
    %1911 = vrot.lane.b32.xlu0 %v1898, 64
    %v1912 = vpop.permute.xlu0 %1911
    %v1917 = vunpack.c.l.b16 %v1899
    %v1918 = vunpack.c.l.b16 %v1900
    %v1919 = vunpack.c.l.b16 %v1901
    %v1920 = vunpack.c.l.b16 %v1902
    %v1921 = vpack.c.b16 %v1918, %v1917
    %v1922 = vpack.c.b16 %v1920, %v1919
    %v1926 = vsel %vm155, %v1912, 0
    %1928 = vmatprep.subr.bf16.mxu0 0
    %1929 = vmatpush1.bf16.msra.mxu0 %v1921
    %1930 = vmatprep.subr.bf16.mxu0 0
    %1931 = vmatpush1.bf16.msra.mxu0 %v1922
    %1932 = vmatprep.subr.bf16.mxu0 0
    %1933 = vmatpush1.bf16.msra.mxu0 0
    %1934 = vmatprep.subr.bf16.mxu0 0
    %1935 = vmatpush1.bf16.msra.mxu0 0
    %1936 = vmatprep.subr.bf16.mxu0 0
    %1937 = vmatpush1.bf16.msra.mxu0 0
    %1938 = vmatprep.subr.bf16.mxu0 0
    %1939 = vmatpush1.bf16.msra.mxu0 0
    %1940 = vmatprep.subr.bf16.mxu0 0
    %1941 = vmatpush1.bf16.msra.mxu0 0
    %1942 = vmatprep.subr.bf16.mxu0 0
    %1943 = vmatpush1.bf16.msra.mxu0 0
    %1944 = vmatprep.subr.bf16.mxu0 0
    %1945 = vmatpush1.bf16.msra.mxu0 0
    %1946 = vmatprep.subr.bf16.mxu0 0
    %1947 = vmatpush1.bf16.msra.mxu0 0
    %1948 = vmatprep.subr.bf16.mxu0 0
    %1949 = vmatpush1.bf16.msra.mxu0 0
    %1950 = vmatprep.subr.bf16.mxu0 0
    %1951 = vmatpush1.bf16.msra.mxu0 0
    %1952 = vmatprep.subr.bf16.mxu0 0
    %1953 = vmatpush1.bf16.msra.mxu0 0
    %1954 = vmatprep.subr.bf16.mxu0 0
    %1955 = vmatpush1.bf16.msra.mxu0 0
    %1956 = vmatprep.subr.bf16.mxu0 0
    %1957 = vmatpush1.bf16.msra.mxu0 0
    %1958 = vmatprep.subr.bf16.mxu0 0
    %1959 = vmatpush1.bf16.msra.mxu0 0
    %1960 = vmatprep.mubr.bf16.mxu0 0
    %1961 = vmatmul.mubr.bf16.gmra.mrb[0].mxu0 %v1926
    %v1962 = vpop.f32.mrb[0].mxu0
    %v1963 = vadd.f32 %v1908, %v1962
    %v1964 = vpop.f32.mrb[0].mxu0
    %v1965 = vpop.f32.mrb[0].mxu0
    %v1966 = vpop.f32.mrb[0].mxu0
    %1967 = vdwg.mxu0
    %v1968 = vmax.f32 %v1963, 0.0
    %v1969 = vpack.c.bf16 %v1968, %v1968
    %v1970 = vld [vmem:[%s9] sm:$0xf]
    %v1971 = vld [vmem:[%s10] sm:$0x1]
    %v1973 = vlaneseq
    %v1974 = vshrl.u32 %v1973, 7
    %v1975 = vsub.s32 0, %v1974
    %v1976 = vrot.slane %v1971, %v1975
    %vm1978 = vcmask 64512
    %v1980 = vsel %vm1978, %v1969, 0
    %vm1982 = vcmask 1043456
    %v1984 = vsel %vm1982, %v1970, 0
    %1986 = vmatprep.subr.bf16.mxu0 0
    %1987 = vmatpush1.bf16.msra.mxu0 %v1984
    %1988 = vmatprep.subr.bf16.mxu0 0
    %1989 = vmatpush1.bf16.msra.mxu0 0
    %1990 = vmatprep.subr.bf16.mxu0 0
    %1991 = vmatpush1.bf16.msra.mxu0 0
    %1992 = vmatprep.subr.bf16.mxu0 0
    %1993 = vmatpush1.bf16.msra.mxu0 0
    %1994 = vmatprep.subr.bf16.mxu0 0
    %1995 = vmatpush1.bf16.msra.mxu0 0
    %1996 = vmatprep.subr.bf16.mxu0 0
    %1997 = vmatpush1.bf16.msra.mxu0 0
    %1998 = vmatprep.subr.bf16.mxu0 0
    %1999 = vmatpush1.bf16.msra.mxu0 0
    %2000 = vmatprep.subr.bf16.mxu0 0
    %2001 = vmatpush1.bf16.msra.mxu0 0
    %2002 = vmatprep.subr.bf16.mxu0 0
    %2003 = vmatpush1.bf16.msra.mxu0 0
    %2004 = vmatprep.subr.bf16.mxu0 0
    %2005 = vmatpush1.bf16.msra.mxu0 0
    %2006 = vmatprep.subr.bf16.mxu0 0
    %2007 = vmatpush1.bf16.msra.mxu0 0
    %2008 = vmatprep.subr.bf16.mxu0 0
    %2009 = vmatpush1.bf16.msra.mxu0 0
    %2010 = vmatprep.subr.bf16.mxu0 0
    %2011 = vmatpush1.bf16.msra.mxu0 0
    %2012 = vmatprep.subr.bf16.mxu0 0
    %2013 = vmatpush1.bf16.msra.mxu0 0
    %2014 = vmatprep.subr.bf16.mxu0 0
    %2015 = vmatpush1.bf16.msra.mxu0 0
    %2016 = vmatprep.subr.bf16.mxu0 0
    %2017 = vmatpush1.bf16.msra.mxu0 0
    %2018 = vmatprep.mubr.bf16.mxu0 0
    %2019 = vmatmul.mubr.bf16.gmra.mrb[0].mxu0 %v1980
    %v2020 = vpop.f32.mrb[0].mxu0
    %v2021 = vadd.f32 %v1976, %v2020
    %v2022 = vpop.f32.mrb[0].mxu0
    %v2023 = vpop.f32.mrb[0].mxu0
    %v2024 = vpop.f32.mrb[0].mxu0
    %2025 = vdwg.mxu0
    %2026 = vst [vmem:[#allocation2] sm:$0x3] %v2021
    // Predicated region
    $region46: #{classificator_forward.1} parent=1 // pred_check
      _
    $region47: #{classificator_forward.1} parent=1 // pred_check_branch
      %2028 = sbr.rel (0) target = $region49
    $region48: #{classificator_forward.1} parent=1 // pred_region
      %s2030 = ssub.s32 32, 32
      %2031 = vsyncadd [#allocation3], %s2030
      %s2033 = sshll.u32 [#allocation2], 4
      %s2034 = int_to_ptr.vmem [resolvable:$true] %s2033
      %2036 = dma.vmem_to_hbm [thread:$0]  %s2034, 32, %s11, [#allocation3]
    $region49: #{classificator_forward.1} parent=1 // pred_fallthru
      _
    // Predicated region
    $region50: #{classificator_forward.1} parent=1 // pred_check
      _
    $region51: #{classificator_forward.1} parent=1 // pred_check_branch
      %2038 = sbr.rel (0) target = $region53
    $region52: #{classificator_forward.1} parent=1 // pred_region
      %2039 = dma.done [#allocation3], 32
    $region53: #{classificator_forward.1} parent=1 // pred_fallthru
      _
    %2040 = vsyncpa [#allocation3], 1

</llo_original>
